<compile_context>
chip_gen: v7x
topology: tpu7x:2x2x1
jax: 0.10.0
libtpu: 0.0.40
codegen_flags: <defaults>
</compile_context>

<pallas_src>
import jax
import jax.numpy as jnp
from jax import lax
from jax.experimental import pallas as pl
from jax.experimental.pallas import tpu as pltpu

NUM_BODIES = 24       # "24body" module
_LANE_TILE = 128      # per-sub-slab lane width: keeps the j-loop working set register-resident
_MAX_TILE_B = 2048    # grid batch tile (lane axis); block VMEM ~0.6 MiB double-buffered


def _nbody_accel_kernel(pos_ref, acc_ref):
    """pos_ref: [3, N, TB] positions (batch on lanes), acc_ref: [3, N, TB] accelerations."""
    num = pos_ref.shape[1]
    n_sub = pos_ref.shape[2] // _LANE_TILE

    @pl.loop(0, n_sub)
    def _(s):
        lane0 = pl.multiple_of(s * _LANE_TILE, _LANE_TILE)
        lanes = pl.ds(lane0, _LANE_TILE)

        # Positions of all bodies for this 128-lane batch slab; f32 compute even for bf16 input.
        px = pos_ref[0, :, lanes].astype(jnp.float32)          # [N, 128]
        py = pos_ref[1, :, lanes].astype(jnp.float32)
        pz = pos_ref[2, :, lanes].astype(jnp.float32)

        ax = jnp.zeros((num, _LANE_TILE), jnp.float32)         # register-resident accumulators
        ay = jnp.zeros((num, _LANE_TILE), jnp.float32)
        az = jnp.zeros((num, _LANE_TILE), jnp.float32)

        # Static (fully unrolled) loop over source body j; all temporaries are [N, 128].
        for j in range(num):
            pjx = px[j:j + 1, :]                               # [1, 128] -> sublane-broadcast
            pjy = py[j:j + 1, :]
            pjz = pz[j:j + 1, :]

            # d = p_j - p_i  ==>  -(p_i - p_j): the required sign with no extra negation.
            dx = pjx - px
            dy = pjy - py
            dz = pjz - pz

            r = dx * dx + dy * dy + dz * dz
            # Diagonal (i == j): d is exactly 0, so that term contributes 0; the max() only
            # keeps rsqrt finite.  (Genuinely coincident distinct bodies yield a large finite
            # value here instead of the inf/NaN the PyTorch loop would produce.)
            r = jnp.maximum(r, 1e-20)

            srs = lax.rsqrt(r)                                 # single EUP op
            inv = srs * srs * srs                              # r ** -1.5 via two VPU muls

            ax = ax + dx * inv
            ay = ay + dy * inv
            az = az + dz * inv

        out_dt = acc_ref.dtype
        acc_ref[0, :, lanes] = ax.astype(out_dt)
        acc_ref[1, :, lanes] = ay.astype(out_dt)
        acc_ref[2, :, lanes] = az.astype(out_dt)


def _round_up(v, m):
    return ((v + m - 1) // m) * m


def manybody3d_forward(t, x, num=NUM_BODIES):
    """JAX/Pallas equivalent of manybody3D.forward(t, x). x: [B, 6*num]."""
    del t  # unused, as in the torch module
    B = x.shape[0]
    vel = x[:, 3 * num:]                                          # [B, 3N]

    # Deinterleave once: [B, 3N] -> [3, N, B]  (batch becomes the lane axis for the kernel).
    pos = jnp.transpose(x[:, : 3 * num].reshape(B, num, 3), (2, 1, 0))

    b128 = _round_up(B, _LANE_TILE)
    tile_b = min(_MAX_TILE_B, b128)
    if b128 >= 2 * _LANE_TILE:
        # Keep at least 2 grid steps so the "parallel" batch axis can feed both v7x TensorCores.
        tile_b = min(tile_b, (b128 // 2) // _LANE_TILE * _LANE_TILE)
    tile_b = max(tile_b, _LANE_TILE)
    b_pad = _round_up(B, tile_b)
    if b_pad != B:
        # edge-pad so padded lanes hold real (finite) positions; they are sliced off below.
        pos = jnp.pad(pos, ((0, 0), (0, 0), (0, b_pad - B)), mode="edge")

    acc = pl.pallas_call(
        _nbody_accel_kernel,
        out_shape=jax.ShapeDtypeStruct((3, num, b_pad), x.dtype),
        grid_spec=pltpu.PrefetchScalarGridSpec(
            num_scalar_prefetch=0,
            grid=(b_pad // tile_b,),
            in_specs=[pl.BlockSpec((3, num, tile_b), lambda b: (0, 0, b))],
            out_specs=pl.BlockSpec((3, num, tile_b), lambda b: (0, 0, b)),
        ),
        compiler_params=pltpu.CompilerParams(
            dimension_semantics=("parallel",),   # shard batch grid across TCs on v7x; harmless elsewhere
        ),
    )(pos)

    # Re-interleave: [3, N, B] -> [B, 3N] as (ax0, ay0, az0, ax1, ...); concat fuses in XLA.
    acc = jnp.transpose(acc[:, :, :B], (2, 1, 0)).reshape(B, 3 * num)
    return jnp.concatenate([vel, acc], axis=-1)                   # [B, 6*num]


def _reference_forward(t, x, num=NUM_BODIES):
    """Pure-JAX reference mirroring the torch loops (for correctness checking)."""
    B = x.shape[0]
    dx = jnp.zeros_like(x)
    dx = dx.at[:, : num * 3].set(x[:, num * 3:])
    for i in range(num):
        acc = jnp.zeros((B, 3), x.dtype)
        for j in range(num):
            if j != i:
                xi = x[:, i * 3: i * 3 + 3]
                xj = x[:, j * 3: j * 3 + 3]
                d = xi - xj
                r = jnp.sum(d * d, axis=1, keepdims=True)
                acc = acc + (-(d) / r ** 1.5)
        dx = dx.at[:, num * 3 + i * 3: num * 3 + i * 3 + 3].add(acc)
    return dx


if __name__ == "__main__":
    key = jax.random.PRNGKey(0)
    B = 2
    x = jax.random.normal(key, (B, 6 * NUM_BODIES), dtype=jnp.float32)
    t = jnp.zeros((), dtype=jnp.float32)

    out = jax.jit(manybody3d_forward)(t, x)
    out = jax.block_until_ready(out)

    ref = _reference_forward(t, x)
    assert out.shape == (B, 6 * NUM_BODIES)
    assert jnp.allclose(out, ref, rtol=1e-4, atol=1e-4), "mismatch vs reference"

    print("KERNEL_OK")
</pallas_src>

<mosaic_0001>
module attributes {stable_mosaic.version = 11 : i64} {
  func.func @_nbody_accel_kernel(%arg0: i32, %arg1: memref<3x24x128xf32, #tpu.memory_space<vmem>>, %arg2: memref<3x24x128xf32, #tpu.memory_space<vmem>>) attributes {dimension_semantics = [#tpu.dimension_semantics<parallel>], iteration_bounds = array<i64: 1>, scalar_prefetch = 0 : i64, scratch_operands = 0 : i64, tpu.core_type = #tpu.core_type<tc>, window_params = [{transform_indices = @transform_0, window_bounds = array<i64: 3, 24, 128>}, {transform_indices = @transform_1, window_bounds = array<i64: 3, 24, 128>}]} {
    %c0_i32 = arith.constant 0 : i32
    %c1_i32 = arith.constant 1 : i32
    %0 = arith.muli %c0_i32, %c1_i32 : i32
    %c0_i32_0 = arith.constant 0 : i32
    %1 = arith.addi %c0_i32_0, %0 : i32
    %c128_i32 = arith.constant 128 : i32
    %2 = arith.muli %1, %c128_i32 : i32
    %3 = tpu.assume_multiple %2, 128 : i32
    %c0 = arith.constant 0 : index
    %c0_1 = arith.constant 0 : index
    %4 = arith.index_cast %3 : i32 to index
    %5 = vector.load %arg1[%c0, %c0_1, %4] : memref<3x24x128xf32, #tpu.memory_space<vmem>>, vector<1x24x128xf32>
    %6 = vector.shape_cast %5 : vector<1x24x128xf32> to vector<24x128xf32>
    %c1 = arith.constant 1 : index
    %c0_2 = arith.constant 0 : index
    %7 = arith.index_cast %3 : i32 to index
    %8 = vector.load %arg1[%c1, %c0_2, %7] : memref<3x24x128xf32, #tpu.memory_space<vmem>>, vector<1x24x128xf32>
    %9 = vector.shape_cast %8 : vector<1x24x128xf32> to vector<24x128xf32>
    %c2 = arith.constant 2 : index
    %c0_3 = arith.constant 0 : index
    %10 = arith.index_cast %3 : i32 to index
    %11 = vector.load %arg1[%c2, %c0_3, %10] : memref<3x24x128xf32, #tpu.memory_space<vmem>>, vector<1x24x128xf32>
    %12 = vector.shape_cast %11 : vector<1x24x128xf32> to vector<24x128xf32>
    %cst = arith.constant 0.000000e+00 : f32
    %13 = vector.broadcast %cst : f32 to vector<24x128xf32>
    %cst_4 = arith.constant 0.000000e+00 : f32
    %14 = vector.broadcast %cst_4 : f32 to vector<24x128xf32>
    %cst_5 = arith.constant 0.000000e+00 : f32
    %15 = vector.broadcast %cst_5 : f32 to vector<24x128xf32>
    %16 = vector.extract_strided_slice %6 {offsets = [0, 0], sizes = [1, 128], strides = [1, 1]} : vector<24x128xf32> to vector<1x128xf32>
    %17 = vector.extract_strided_slice %9 {offsets = [0, 0], sizes = [1, 128], strides = [1, 1]} : vector<24x128xf32> to vector<1x128xf32>
    %18 = vector.extract_strided_slice %12 {offsets = [0, 0], sizes = [1, 128], strides = [1, 1]} : vector<24x128xf32> to vector<1x128xf32>
    %19 = vector.broadcast %16 : vector<1x128xf32> to vector<24x128xf32>
    %20 = arith.subf %19, %6 : vector<24x128xf32>
    %21 = vector.broadcast %17 : vector<1x128xf32> to vector<24x128xf32>
    %22 = arith.subf %21, %9 : vector<24x128xf32>
    %23 = vector.broadcast %18 : vector<1x128xf32> to vector<24x128xf32>
    %24 = arith.subf %23, %12 : vector<24x128xf32>
    %25 = arith.mulf %20, %20 : vector<24x128xf32>
    %26 = arith.mulf %22, %22 : vector<24x128xf32>
    %27 = arith.addf %25, %26 : vector<24x128xf32>
    %28 = arith.mulf %24, %24 : vector<24x128xf32>
    %29 = arith.addf %27, %28 : vector<24x128xf32>
    %cst_6 = arith.constant 9.99999968E-21 : f32
    %30 = vector.broadcast %cst_6 : f32 to vector<24x128xf32>
    %31 = arith.maximumf %29, %30 : vector<24x128xf32>
    %32 = math.rsqrt %31 : vector<24x128xf32>
    %33 = arith.mulf %32, %32 : vector<24x128xf32>
    %34 = arith.mulf %33, %32 : vector<24x128xf32>
    %35 = arith.mulf %20, %34 : vector<24x128xf32>
    %36 = arith.addf %13, %35 : vector<24x128xf32>
    %37 = arith.mulf %22, %34 : vector<24x128xf32>
    %38 = arith.addf %14, %37 : vector<24x128xf32>
    %39 = arith.mulf %24, %34 : vector<24x128xf32>
    %40 = arith.addf %15, %39 : vector<24x128xf32>
    %41 = vector.extract_strided_slice %6 {offsets = [1, 0], sizes = [1, 128], strides = [1, 1]} : vector<24x128xf32> to vector<1x128xf32>
    %42 = vector.extract_strided_slice %9 {offsets = [1, 0], sizes = [1, 128], strides = [1, 1]} : vector<24x128xf32> to vector<1x128xf32>
    %43 = vector.extract_strided_slice %12 {offsets = [1, 0], sizes = [1, 128], strides = [1, 1]} : vector<24x128xf32> to vector<1x128xf32>
    %44 = vector.broadcast %41 : vector<1x128xf32> to vector<24x128xf32>
    %45 = arith.subf %44, %6 : vector<24x128xf32>
    %46 = vector.broadcast %42 : vector<1x128xf32> to vector<24x128xf32>
    %47 = arith.subf %46, %9 : vector<24x128xf32>
    %48 = vector.broadcast %43 : vector<1x128xf32> to vector<24x128xf32>
    %49 = arith.subf %48, %12 : vector<24x128xf32>
    %50 = arith.mulf %45, %45 : vector<24x128xf32>
    %51 = arith.mulf %47, %47 : vector<24x128xf32>
    %52 = arith.addf %50, %51 : vector<24x128xf32>
    %53 = arith.mulf %49, %49 : vector<24x128xf32>
    %54 = arith.addf %52, %53 : vector<24x128xf32>
    %cst_7 = arith.constant 9.99999968E-21 : f32
    %55 = vector.broadcast %cst_7 : f32 to vector<24x128xf32>
    %56 = arith.maximumf %54, %55 : vector<24x128xf32>
    %57 = math.rsqrt %56 : vector<24x128xf32>
    %58 = arith.mulf %57, %57 : vector<24x128xf32>
    %59 = arith.mulf %58, %57 : vector<24x128xf32>
    %60 = arith.mulf %45, %59 : vector<24x128xf32>
    %61 = arith.addf %36, %60 : vector<24x128xf32>
    %62 = arith.mulf %47, %59 : vector<24x128xf32>
    %63 = arith.addf %38, %62 : vector<24x128xf32>
    %64 = arith.mulf %49, %59 : vector<24x128xf32>
    %65 = arith.addf %40, %64 : vector<24x128xf32>
    %66 = vector.extract_strided_slice %6 {offsets = [2, 0], sizes = [1, 128], strides = [1, 1]} : vector<24x128xf32> to vector<1x128xf32>
    %67 = vector.extract_strided_slice %9 {offsets = [2, 0], sizes = [1, 128], strides = [1, 1]} : vector<24x128xf32> to vector<1x128xf32>
    %68 = vector.extract_strided_slice %12 {offsets = [2, 0], sizes = [1, 128], strides = [1, 1]} : vector<24x128xf32> to vector<1x128xf32>
    %69 = vector.broadcast %66 : vector<1x128xf32> to vector<24x128xf32>
    %70 = arith.subf %69, %6 : vector<24x128xf32>
    %71 = vector.broadcast %67 : vector<1x128xf32> to vector<24x128xf32>
    %72 = arith.subf %71, %9 : vector<24x128xf32>
    %73 = vector.broadcast %68 : vector<1x128xf32> to vector<24x128xf32>
    %74 = arith.subf %73, %12 : vector<24x128xf32>
    %75 = arith.mulf %70, %70 : vector<24x128xf32>
    %76 = arith.mulf %72, %72 : vector<24x128xf32>
    %77 = arith.addf %75, %76 : vector<24x128xf32>
    %78 = arith.mulf %74, %74 : vector<24x128xf32>
    %79 = arith.addf %77, %78 : vector<24x128xf32>
    %cst_8 = arith.constant 9.99999968E-21 : f32
    %80 = vector.broadcast %cst_8 : f32 to vector<24x128xf32>
    %81 = arith.maximumf %79, %80 : vector<24x128xf32>
    %82 = math.rsqrt %81 : vector<24x128xf32>
    %83 = arith.mulf %82, %82 : vector<24x128xf32>
    %84 = arith.mulf %83, %82 : vector<24x128xf32>
    %85 = arith.mulf %70, %84 : vector<24x128xf32>
    %86 = arith.addf %61, %85 : vector<24x128xf32>
    %87 = arith.mulf %72, %84 : vector<24x128xf32>
    %88 = arith.addf %63, %87 : vector<24x128xf32>
    %89 = arith.mulf %74, %84 : vector<24x128xf32>
    %90 = arith.addf %65, %89 : vector<24x128xf32>
    %91 = vector.extract_strided_slice %6 {offsets = [3, 0], sizes = [1, 128], strides = [1, 1]} : vector<24x128xf32> to vector<1x128xf32>
    %92 = vector.extract_strided_slice %9 {offsets = [3, 0], sizes = [1, 128], strides = [1, 1]} : vector<24x128xf32> to vector<1x128xf32>
    %93 = vector.extract_strided_slice %12 {offsets = [3, 0], sizes = [1, 128], strides = [1, 1]} : vector<24x128xf32> to vector<1x128xf32>
    %94 = vector.broadcast %91 : vector<1x128xf32> to vector<24x128xf32>
    %95 = arith.subf %94, %6 : vector<24x128xf32>
    %96 = vector.broadcast %92 : vector<1x128xf32> to vector<24x128xf32>
    %97 = arith.subf %96, %9 : vector<24x128xf32>
    %98 = vector.broadcast %93 : vector<1x128xf32> to vector<24x128xf32>
    %99 = arith.subf %98, %12 : vector<24x128xf32>
    %100 = arith.mulf %95, %95 : vector<24x128xf32>
    %101 = arith.mulf %97, %97 : vector<24x128xf32>
    %102 = arith.addf %100, %101 : vector<24x128xf32>
    %103 = arith.mulf %99, %99 : vector<24x128xf32>
    %104 = arith.addf %102, %103 : vector<24x128xf32>
    %cst_9 = arith.constant 9.99999968E-21 : f32
    %105 = vector.broadcast %cst_9 : f32 to vector<24x128xf32>
    %106 = arith.maximumf %104, %105 : vector<24x128xf32>
    %107 = math.rsqrt %106 : vector<24x128xf32>
    %108 = arith.mulf %107, %107 : vector<24x128xf32>
    %109 = arith.mulf %108, %107 : vector<24x128xf32>
    %110 = arith.mulf %95, %109 : vector<24x128xf32>
    %111 = arith.addf %86, %110 : vector<24x128xf32>
    %112 = arith.mulf %97, %109 : vector<24x128xf32>
    %113 = arith.addf %88, %112 : vector<24x128xf32>
    %114 = arith.mulf %99, %109 : vector<24x128xf32>
    %115 = arith.addf %90, %114 : vector<24x128xf32>
    %116 = vector.extract_strided_slice %6 {offsets = [4, 0], sizes = [1, 128], strides = [1, 1]} : vector<24x128xf32> to vector<1x128xf32>
    %117 = vector.extract_strided_slice %9 {offsets = [4, 0], sizes = [1, 128], strides = [1, 1]} : vector<24x128xf32> to vector<1x128xf32>
    %118 = vector.extract_strided_slice %12 {offsets = [4, 0], sizes = [1, 128], strides = [1, 1]} : vector<24x128xf32> to vector<1x128xf32>
    %119 = vector.broadcast %116 : vector<1x128xf32> to vector<24x128xf32>
    %120 = arith.subf %119, %6 : vector<24x128xf32>
    %121 = vector.broadcast %117 : vector<1x128xf32> to vector<24x128xf32>
    %122 = arith.subf %121, %9 : vector<24x128xf32>
    %123 = vector.broadcast %118 : vector<1x128xf32> to vector<24x128xf32>
    %124 = arith.subf %123, %12 : vector<24x128xf32>
    %125 = arith.mulf %120, %120 : vector<24x128xf32>
    %126 = arith.mulf %122, %122 : vector<24x128xf32>
    %127 = arith.addf %125, %126 : vector<24x128xf32>
    %128 = arith.mulf %124, %124 : vector<24x128xf32>
    %129 = arith.addf %127, %128 : vector<24x128xf32>
    %cst_10 = arith.constant 9.99999968E-21 : f32
    %130 = vector.broadcast %cst_10 : f32 to vector<24x128xf32>
    %131 = arith.maximumf %129, %130 : vector<24x128xf32>
    %132 = math.rsqrt %131 : vector<24x128xf32>
    %133 = arith.mulf %132, %132 : vector<24x128xf32>
    %134 = arith.mulf %133, %132 : vector<24x128xf32>
    %135 = arith.mulf %120, %134 : vector<24x128xf32>
    %136 = arith.addf %111, %135 : vector<24x128xf32>
    %137 = arith.mulf %122, %134 : vector<24x128xf32>
    %138 = arith.addf %113, %137 : vector<24x128xf32>
    %139 = arith.mulf %124, %134 : vector<24x128xf32>
    %140 = arith.addf %115, %139 : vector<24x128xf32>
    %141 = vector.extract_strided_slice %6 {offsets = [5, 0], sizes = [1, 128], strides = [1, 1]} : vector<24x128xf32> to vector<1x128xf32>
    %142 = vector.extract_strided_slice %9 {offsets = [5, 0], sizes = [1, 128], strides = [1, 1]} : vector<24x128xf32> to vector<1x128xf32>
    %143 = vector.extract_strided_slice %12 {offsets = [5, 0], sizes = [1, 128], strides = [1, 1]} : vector<24x128xf32> to vector<1x128xf32>
    %144 = vector.broadcast %141 : vector<1x128xf32> to vector<24x128xf32>
    %145 = arith.subf %144, %6 : vector<24x128xf32>
    %146 = vector.broadcast %142 : vector<1x128xf32> to vector<24x128xf32>
    %147 = arith.subf %146, %9 : vector<24x128xf32>
    %148 = vector.broadcast %143 : vector<1x128xf32> to vector<24x128xf32>
    %149 = arith.subf %148, %12 : vector<24x128xf32>
    %150 = arith.mulf %145, %145 : vector<24x128xf32>
    %151 = arith.mulf %147, %147 : vector<24x128xf32>
    %152 = arith.addf %150, %151 : vector<24x128xf32>
    %153 = arith.mulf %149, %149 : vector<24x128xf32>
    %154 = arith.addf %152, %153 : vector<24x128xf32>
    %cst_11 = arith.constant 9.99999968E-21 : f32
    %155 = vector.broadcast %cst_11 : f32 to vector<24x128xf32>
    %156 = arith.maximumf %154, %155 : vector<24x128xf32>
    %157 = math.rsqrt %156 : vector<24x128xf32>
    %158 = arith.mulf %157, %157 : vector<24x128xf32>
    %159 = arith.mulf %158, %157 : vector<24x128xf32>
    %160 = arith.mulf %145, %159 : vector<24x128xf32>
    %161 = arith.addf %136, %160 : vector<24x128xf32>
    %162 = arith.mulf %147, %159 : vector<24x128xf32>
    %163 = arith.addf %138, %162 : vector<24x128xf32>
    %164 = arith.mulf %149, %159 : vector<24x128xf32>
    %165 = arith.addf %140, %164 : vector<24x128xf32>
    %166 = vector.extract_strided_slice %6 {offsets = [6, 0], sizes = [1, 128], strides = [1, 1]} : vector<24x128xf32> to vector<1x128xf32>
    %167 = vector.extract_strided_slice %9 {offsets = [6, 0], sizes = [1, 128], strides = [1, 1]} : vector<24x128xf32> to vector<1x128xf32>
    %168 = vector.extract_strided_slice %12 {offsets = [6, 0], sizes = [1, 128], strides = [1, 1]} : vector<24x128xf32> to vector<1x128xf32>
    %169 = vector.broadcast %166 : vector<1x128xf32> to vector<24x128xf32>
    %170 = arith.subf %169, %6 : vector<24x128xf32>
    %171 = vector.broadcast %167 : vector<1x128xf32> to vector<24x128xf32>
    %172 = arith.subf %171, %9 : vector<24x128xf32>
    %173 = vector.broadcast %168 : vector<1x128xf32> to vector<24x128xf32>
    %174 = arith.subf %173, %12 : vector<24x128xf32>
    %175 = arith.mulf %170, %170 : vector<24x128xf32>
    %176 = arith.mulf %172, %172 : vector<24x128xf32>
    %177 = arith.addf %175, %176 : vector<24x128xf32>
    %178 = arith.mulf %174, %174 : vector<24x128xf32>
    %179 = arith.addf %177, %178 : vector<24x128xf32>
    %cst_12 = arith.constant 9.99999968E-21 : f32
    %180 = vector.broadcast %cst_12 : f32 to vector<24x128xf32>
    %181 = arith.maximumf %179, %180 : vector<24x128xf32>
    %182 = math.rsqrt %181 : vector<24x128xf32>
    %183 = arith.mulf %182, %182 : vector<24x128xf32>
    %184 = arith.mulf %183, %182 : vector<24x128xf32>
    %185 = arith.mulf %170, %184 : vector<24x128xf32>
    %186 = arith.addf %161, %185 : vector<24x128xf32>
    %187 = arith.mulf %172, %184 : vector<24x128xf32>
    %188 = arith.addf %163, %187 : vector<24x128xf32>
    %189 = arith.mulf %174, %184 : vector<24x128xf32>
    %190 = arith.addf %165, %189 : vector<24x128xf32>
    %191 = vector.extract_strided_slice %6 {offsets = [7, 0], sizes = [1, 128], strides = [1, 1]} : vector<24x128xf32> to vector<1x128xf32>
    %192 = vector.extract_strided_slice %9 {offsets = [7, 0], sizes = [1, 128], strides = [1, 1]} : vector<24x128xf32> to vector<1x128xf32>
    %193 = vector.extract_strided_slice %12 {offsets = [7, 0], sizes = [1, 128], strides = [1, 1]} : vector<24x128xf32> to vector<1x128xf32>
    %194 = vector.broadcast %191 : vector<1x128xf32> to vector<24x128xf32>
    %195 = arith.subf %194, %6 : vector<24x128xf32>
    %196 = vector.broadcast %192 : vector<1x128xf32> to vector<24x128xf32>
    %197 = arith.subf %196, %9 : vector<24x128xf32>
    %198 = vector.broadcast %193 : vector<1x128xf32> to vector<24x128xf32>
    %199 = arith.subf %198, %12 : vector<24x128xf32>
    %200 = arith.mulf %195, %195 : vector<24x128xf32>
    %201 = arith.mulf %197, %197 : vector<24x128xf32>
    %202 = arith.addf %200, %201 : vector<24x128xf32>
    %203 = arith.mulf %199, %199 : vector<24x128xf32>
    %204 = arith.addf %202, %203 : vector<24x128xf32>
    %cst_13 = arith.constant 9.99999968E-21 : f32
    %205 = vector.broadcast %cst_13 : f32 to vector<24x128xf32>
    %206 = arith.maximumf %204, %205 : vector<24x128xf32>
    %207 = math.rsqrt %206 : vector<24x128xf32>
    %208 = arith.mulf %207, %207 : vector<24x128xf32>
    %209 = arith.mulf %208, %207 : vector<24x128xf32>
    %210 = arith.mulf %195, %209 : vector<24x128xf32>
    %211 = arith.addf %186, %210 : vector<24x128xf32>
    %212 = arith.mulf %197, %209 : vector<24x128xf32>
    %213 = arith.addf %188, %212 : vector<24x128xf32>
    %214 = arith.mulf %199, %209 : vector<24x128xf32>
    %215 = arith.addf %190, %214 : vector<24x128xf32>
    %216 = vector.extract_strided_slice %6 {offsets = [8, 0], sizes = [1, 128], strides = [1, 1]} : vector<24x128xf32> to vector<1x128xf32>
    %217 = vector.extract_strided_slice %9 {offsets = [8, 0], sizes = [1, 128], strides = [1, 1]} : vector<24x128xf32> to vector<1x128xf32>
    %218 = vector.extract_strided_slice %12 {offsets = [8, 0], sizes = [1, 128], strides = [1, 1]} : vector<24x128xf32> to vector<1x128xf32>
    %219 = vector.broadcast %216 : vector<1x128xf32> to vector<24x128xf32>
    %220 = arith.subf %219, %6 : vector<24x128xf32>
    %221 = vector.broadcast %217 : vector<1x128xf32> to vector<24x128xf32>
    %222 = arith.subf %221, %9 : vector<24x128xf32>
    %223 = vector.broadcast %218 : vector<1x128xf32> to vector<24x128xf32>
    %224 = arith.subf %223, %12 : vector<24x128xf32>
    %225 = arith.mulf %220, %220 : vector<24x128xf32>
    %226 = arith.mulf %222, %222 : vector<24x128xf32>
    %227 = arith.addf %225, %226 : vector<24x128xf32>
    %228 = arith.mulf %224, %224 : vector<24x128xf32>
    %229 = arith.addf %227, %228 : vector<24x128xf32>
    %cst_14 = arith.constant 9.99999968E-21 : f32
    %230 = vector.broadcast %cst_14 : f32 to vector<24x128xf32>
    %231 = arith.maximumf %229, %230 : vector<24x128xf32>
    %232 = math.rsqrt %231 : vector<24x128xf32>
    %233 = arith.mulf %232, %232 : vector<24x128xf32>
    %234 = arith.mulf %233, %232 : vector<24x128xf32>
    %235 = arith.mulf %220, %234 : vector<24x128xf32>
    %236 = arith.addf %211, %235 : vector<24x128xf32>
    %237 = arith.mulf %222, %234 : vector<24x128xf32>
    %238 = arith.addf %213, %237 : vector<24x128xf32>
    %239 = arith.mulf %224, %234 : vector<24x128xf32>
    %240 = arith.addf %215, %239 : vector<24x128xf32>
    %241 = vector.extract_strided_slice %6 {offsets = [9, 0], sizes = [1, 128], strides = [1, 1]} : vector<24x128xf32> to vector<1x128xf32>
    %242 = vector.extract_strided_slice %9 {offsets = [9, 0], sizes = [1, 128], strides = [1, 1]} : vector<24x128xf32> to vector<1x128xf32>
    %243 = vector.extract_strided_slice %12 {offsets = [9, 0], sizes = [1, 128], strides = [1, 1]} : vector<24x128xf32> to vector<1x128xf32>
    %244 = vector.broadcast %241 : vector<1x128xf32> to vector<24x128xf32>
    %245 = arith.subf %244, %6 : vector<24x128xf32>
    %246 = vector.broadcast %242 : vector<1x128xf32> to vector<24x128xf32>
    %247 = arith.subf %246, %9 : vector<24x128xf32>
    %248 = vector.broadcast %243 : vector<1x128xf32> to vector<24x128xf32>
    %249 = arith.subf %248, %12 : vector<24x128xf32>
    %250 = arith.mulf %245, %245 : vector<24x128xf32>
    %251 = arith.mulf %247, %247 : vector<24x128xf32>
    %252 = arith.addf %250, %251 : vector<24x128xf32>
    %253 = arith.mulf %249, %249 : vector<24x128xf32>
    %254 = arith.addf %252, %253 : vector<24x128xf32>
    %cst_15 = arith.constant 9.99999968E-21 : f32
    %255 = vector.broadcast %cst_15 : f32 to vector<24x128xf32>
    %256 = arith.maximumf %254, %255 : vector<24x128xf32>
    %257 = math.rsqrt %256 : vector<24x128xf32>
    %258 = arith.mulf %257, %257 : vector<24x128xf32>
    %259 = arith.mulf %258, %257 : vector<24x128xf32>
    %260 = arith.mulf %245, %259 : vector<24x128xf32>
    %261 = arith.addf %236, %260 : vector<24x128xf32>
    %262 = arith.mulf %247, %259 : vector<24x128xf32>
    %263 = arith.addf %238, %262 : vector<24x128xf32>
    %264 = arith.mulf %249, %259 : vector<24x128xf32>
    %265 = arith.addf %240, %264 : vector<24x128xf32>
    %266 = vector.extract_strided_slice %6 {offsets = [10, 0], sizes = [1, 128], strides = [1, 1]} : vector<24x128xf32> to vector<1x128xf32>
    %267 = vector.extract_strided_slice %9 {offsets = [10, 0], sizes = [1, 128], strides = [1, 1]} : vector<24x128xf32> to vector<1x128xf32>
    %268 = vector.extract_strided_slice %12 {offsets = [10, 0], sizes = [1, 128], strides = [1, 1]} : vector<24x128xf32> to vector<1x128xf32>
    %269 = vector.broadcast %266 : vector<1x128xf32> to vector<24x128xf32>
    %270 = arith.subf %269, %6 : vector<24x128xf32>
    %271 = vector.broadcast %267 : vector<1x128xf32> to vector<24x128xf32>
    %272 = arith.subf %271, %9 : vector<24x128xf32>
    %273 = vector.broadcast %268 : vector<1x128xf32> to vector<24x128xf32>
    %274 = arith.subf %273, %12 : vector<24x128xf32>
    %275 = arith.mulf %270, %270 : vector<24x128xf32>
    %276 = arith.mulf %272, %272 : vector<24x128xf32>
    %277 = arith.addf %275, %276 : vector<24x128xf32>
    %278 = arith.mulf %274, %274 : vector<24x128xf32>
    %279 = arith.addf %277, %278 : vector<24x128xf32>
    %cst_16 = arith.constant 9.99999968E-21 : f32
    %280 = vector.broadcast %cst_16 : f32 to vector<24x128xf32>
    %281 = arith.maximumf %279, %280 : vector<24x128xf32>
    %282 = math.rsqrt %281 : vector<24x128xf32>
    %283 = arith.mulf %282, %282 : vector<24x128xf32>
    %284 = arith.mulf %283, %282 : vector<24x128xf32>
    %285 = arith.mulf %270, %284 : vector<24x128xf32>
    %286 = arith.addf %261, %285 : vector<24x128xf32>
    %287 = arith.mulf %272, %284 : vector<24x128xf32>
    %288 = arith.addf %263, %287 : vector<24x128xf32>
    %289 = arith.mulf %274, %284 : vector<24x128xf32>
    %290 = arith.addf %265, %289 : vector<24x128xf32>
    %291 = vector.extract_strided_slice %6 {offsets = [11, 0], sizes = [1, 128], strides = [1, 1]} : vector<24x128xf32> to vector<1x128xf32>
    %292 = vector.extract_strided_slice %9 {offsets = [11, 0], sizes = [1, 128], strides = [1, 1]} : vector<24x128xf32> to vector<1x128xf32>
    %293 = vector.extract_strided_slice %12 {offsets = [11, 0], sizes = [1, 128], strides = [1, 1]} : vector<24x128xf32> to vector<1x128xf32>
    %294 = vector.broadcast %291 : vector<1x128xf32> to vector<24x128xf32>
    %295 = arith.subf %294, %6 : vector<24x128xf32>
    %296 = vector.broadcast %292 : vector<1x128xf32> to vector<24x128xf32>
    %297 = arith.subf %296, %9 : vector<24x128xf32>
    %298 = vector.broadcast %293 : vector<1x128xf32> to vector<24x128xf32>
    %299 = arith.subf %298, %12 : vector<24x128xf32>
    %300 = arith.mulf %295, %295 : vector<24x128xf32>
    %301 = arith.mulf %297, %297 : vector<24x128xf32>
    %302 = arith.addf %300, %301 : vector<24x128xf32>
    %303 = arith.mulf %299, %299 : vector<24x128xf32>
    %304 = arith.addf %302, %303 : vector<24x128xf32>
    %cst_17 = arith.constant 9.99999968E-21 : f32
    %305 = vector.broadcast %cst_17 : f32 to vector<24x128xf32>
    %306 = arith.maximumf %304, %305 : vector<24x128xf32>
    %307 = math.rsqrt %306 : vector<24x128xf32>
    %308 = arith.mulf %307, %307 : vector<24x128xf32>
    %309 = arith.mulf %308, %307 : vector<24x128xf32>
    %310 = arith.mulf %295, %309 : vector<24x128xf32>
    %311 = arith.addf %286, %310 : vector<24x128xf32>
    %312 = arith.mulf %297, %309 : vector<24x128xf32>
    %313 = arith.addf %288, %312 : vector<24x128xf32>
    %314 = arith.mulf %299, %309 : vector<24x128xf32>
    %315 = arith.addf %290, %314 : vector<24x128xf32>
    %316 = vector.extract_strided_slice %6 {offsets = [12, 0], sizes = [1, 128], strides = [1, 1]} : vector<24x128xf32> to vector<1x128xf32>
    %317 = vector.extract_strided_slice %9 {offsets = [12, 0], sizes = [1, 128], strides = [1, 1]} : vector<24x128xf32> to vector<1x128xf32>
    %318 = vector.extract_strided_slice %12 {offsets = [12, 0], sizes = [1, 128], strides = [1, 1]} : vector<24x128xf32> to vector<1x128xf32>
    %319 = vector.broadcast %316 : vector<1x128xf32> to vector<24x128xf32>
    %320 = arith.subf %319, %6 : vector<24x128xf32>
    %321 = vector.broadcast %317 : vector<1x128xf32> to vector<24x128xf32>
    %322 = arith.subf %321, %9 : vector<24x128xf32>
    %323 = vector.broadcast %318 : vector<1x128xf32> to vector<24x128xf32>
    %324 = arith.subf %323, %12 : vector<24x128xf32>
    %325 = arith.mulf %320, %320 : vector<24x128xf32>
    %326 = arith.mulf %322, %322 : vector<24x128xf32>
    %327 = arith.addf %325, %326 : vector<24x128xf32>
    %328 = arith.mulf %324, %324 : vector<24x128xf32>
    %329 = arith.addf %327, %328 : vector<24x128xf32>
    %cst_18 = arith.constant 9.99999968E-21 : f32
    %330 = vector.broadcast %cst_18 : f32 to vector<24x128xf32>
    %331 = arith.maximumf %329, %330 : vector<24x128xf32>
    %332 = math.rsqrt %331 : vector<24x128xf32>
    %333 = arith.mulf %332, %332 : vector<24x128xf32>
    %334 = arith.mulf %333, %332 : vector<24x128xf32>
    %335 = arith.mulf %320, %334 : vector<24x128xf32>
    %336 = arith.addf %311, %335 : vector<24x128xf32>
    %337 = arith.mulf %322, %334 : vector<24x128xf32>
    %338 = arith.addf %313, %337 : vector<24x128xf32>
    %339 = arith.mulf %324, %334 : vector<24x128xf32>
    %340 = arith.addf %315, %339 : vector<24x128xf32>
    %341 = vector.extract_strided_slice %6 {offsets = [13, 0], sizes = [1, 128], strides = [1, 1]} : vector<24x128xf32> to vector<1x128xf32>
    %342 = vector.extract_strided_slice %9 {offsets = [13, 0], sizes = [1, 128], strides = [1, 1]} : vector<24x128xf32> to vector<1x128xf32>
    %343 = vector.extract_strided_slice %12 {offsets = [13, 0], sizes = [1, 128], strides = [1, 1]} : vector<24x128xf32> to vector<1x128xf32>
    %344 = vector.broadcast %341 : vector<1x128xf32> to vector<24x128xf32>
    %345 = arith.subf %344, %6 : vector<24x128xf32>
    %346 = vector.broadcast %342 : vector<1x128xf32> to vector<24x128xf32>
    %347 = arith.subf %346, %9 : vector<24x128xf32>
    %348 = vector.broadcast %343 : vector<1x128xf32> to vector<24x128xf32>
    %349 = arith.subf %348, %12 : vector<24x128xf32>
    %350 = arith.mulf %345, %345 : vector<24x128xf32>
    %351 = arith.mulf %347, %347 : vector<24x128xf32>
    %352 = arith.addf %350, %351 : vector<24x128xf32>
    %353 = arith.mulf %349, %349 : vector<24x128xf32>
    %354 = arith.addf %352, %353 : vector<24x128xf32>
    %cst_19 = arith.constant 9.99999968E-21 : f32
    %355 = vector.broadcast %cst_19 : f32 to vector<24x128xf32>
    %356 = arith.maximumf %354, %355 : vector<24x128xf32>
    %357 = math.rsqrt %356 : vector<24x128xf32>
    %358 = arith.mulf %357, %357 : vector<24x128xf32>
    %359 = arith.mulf %358, %357 : vector<24x128xf32>
    %360 = arith.mulf %345, %359 : vector<24x128xf32>
    %361 = arith.addf %336, %360 : vector<24x128xf32>
    %362 = arith.mulf %347, %359 : vector<24x128xf32>
    %363 = arith.addf %338, %362 : vector<24x128xf32>
    %364 = arith.mulf %349, %359 : vector<24x128xf32>
    %365 = arith.addf %340, %364 : vector<24x128xf32>
    %366 = vector.extract_strided_slice %6 {offsets = [14, 0], sizes = [1, 128], strides = [1, 1]} : vector<24x128xf32> to vector<1x128xf32>
    %367 = vector.extract_strided_slice %9 {offsets = [14, 0], sizes = [1, 128], strides = [1, 1]} : vector<24x128xf32> to vector<1x128xf32>
    %368 = vector.extract_strided_slice %12 {offsets = [14, 0], sizes = [1, 128], strides = [1, 1]} : vector<24x128xf32> to vector<1x128xf32>
    %369 = vector.broadcast %366 : vector<1x128xf32> to vector<24x128xf32>
    %370 = arith.subf %369, %6 : vector<24x128xf32>
    %371 = vector.broadcast %367 : vector<1x128xf32> to vector<24x128xf32>
    %372 = arith.subf %371, %9 : vector<24x128xf32>
    %373 = vector.broadcast %368 : vector<1x128xf32> to vector<24x128xf32>
    %374 = arith.subf %373, %12 : vector<24x128xf32>
    %375 = arith.mulf %370, %370 : vector<24x128xf32>
    %376 = arith.mulf %372, %372 : vector<24x128xf32>
    %377 = arith.addf %375, %376 : vector<24x128xf32>
    %378 = arith.mulf %374, %374 : vector<24x128xf32>
    %379 = arith.addf %377, %378 : vector<24x128xf32>
    %cst_20 = arith.constant 9.99999968E-21 : f32
    %380 = vector.broadcast %cst_20 : f32 to vector<24x128xf32>
    %381 = arith.maximumf %379, %380 : vector<24x128xf32>
    %382 = math.rsqrt %381 : vector<24x128xf32>
    %383 = arith.mulf %382, %382 : vector<24x128xf32>
    %384 = arith.mulf %383, %382 : vector<24x128xf32>
    %385 = arith.mulf %370, %384 : vector<24x128xf32>
    %386 = arith.addf %361, %385 : vector<24x128xf32>
    %387 = arith.mulf %372, %384 : vector<24x128xf32>
    %388 = arith.addf %363, %387 : vector<24x128xf32>
    %389 = arith.mulf %374, %384 : vector<24x128xf32>
    %390 = arith.addf %365, %389 : vector<24x128xf32>
    %391 = vector.extract_strided_slice %6 {offsets = [15, 0], sizes = [1, 128], strides = [1, 1]} : vector<24x128xf32> to vector<1x128xf32>
    %392 = vector.extract_strided_slice %9 {offsets = [15, 0], sizes = [1, 128], strides = [1, 1]} : vector<24x128xf32> to vector<1x128xf32>
    %393 = vector.extract_strided_slice %12 {offsets = [15, 0], sizes = [1, 128], strides = [1, 1]} : vector<24x128xf32> to vector<1x128xf32>
    %394 = vector.broadcast %391 : vector<1x128xf32> to vector<24x128xf32>
    %395 = arith.subf %394, %6 : vector<24x128xf32>
    %396 = vector.broadcast %392 : vector<1x128xf32> to vector<24x128xf32>
    %397 = arith.subf %396, %9 : vector<24x128xf32>
    %398 = vector.broadcast %393 : vector<1x128xf32> to vector<24x128xf32>
    %399 = arith.subf %398, %12 : vector<24x128xf32>
    %400 = arith.mulf %395, %395 : vector<24x128xf32>
    %401 = arith.mulf %397, %397 : vector<24x128xf32>
    %402 = arith.addf %400, %401 : vector<24x128xf32>
    %403 = arith.mulf %399, %399 : vector<24x128xf32>
    %404 = arith.addf %402, %403 : vector<24x128xf32>
    %cst_21 = arith.constant 9.99999968E-21 : f32
    %405 = vector.broadcast %cst_21 : f32 to vector<24x128xf32>
    %406 = arith.maximumf %404, %405 : vector<24x128xf32>
    %407 = math.rsqrt %406 : vector<24x128xf32>
    %408 = arith.mulf %407, %407 : vector<24x128xf32>
    %409 = arith.mulf %408, %407 : vector<24x128xf32>
    %410 = arith.mulf %395, %409 : vector<24x128xf32>
    %411 = arith.addf %386, %410 : vector<24x128xf32>
    %412 = arith.mulf %397, %409 : vector<24x128xf32>
    %413 = arith.addf %388, %412 : vector<24x128xf32>
    %414 = arith.mulf %399, %409 : vector<24x128xf32>
    %415 = arith.addf %390, %414 : vector<24x128xf32>
    %416 = vector.extract_strided_slice %6 {offsets = [16, 0], sizes = [1, 128], strides = [1, 1]} : vector<24x128xf32> to vector<1x128xf32>
    %417 = vector.extract_strided_slice %9 {offsets = [16, 0], sizes = [1, 128], strides = [1, 1]} : vector<24x128xf32> to vector<1x128xf32>
    %418 = vector.extract_strided_slice %12 {offsets = [16, 0], sizes = [1, 128], strides = [1, 1]} : vector<24x128xf32> to vector<1x128xf32>
    %419 = vector.broadcast %416 : vector<1x128xf32> to vector<24x128xf32>
    %420 = arith.subf %419, %6 : vector<24x128xf32>
    %421 = vector.broadcast %417 : vector<1x128xf32> to vector<24x128xf32>
    %422 = arith.subf %421, %9 : vector<24x128xf32>
    %423 = vector.broadcast %418 : vector<1x128xf32> to vector<24x128xf32>
    %424 = arith.subf %423, %12 : vector<24x128xf32>
    %425 = arith.mulf %420, %420 : vector<24x128xf32>
    %426 = arith.mulf %422, %422 : vector<24x128xf32>
    %427 = arith.addf %425, %426 : vector<24x128xf32>
    %428 = arith.mulf %424, %424 : vector<24x128xf32>
    %429 = arith.addf %427, %428 : vector<24x128xf32>
    %cst_22 = arith.constant 9.99999968E-21 : f32
    %430 = vector.broadcast %cst_22 : f32 to vector<24x128xf32>
    %431 = arith.maximumf %429, %430 : vector<24x128xf32>
    %432 = math.rsqrt %431 : vector<24x128xf32>
    %433 = arith.mulf %432, %432 : vector<24x128xf32>
    %434 = arith.mulf %433, %432 : vector<24x128xf32>
    %435 = arith.mulf %420, %434 : vector<24x128xf32>
    %436 = arith.addf %411, %435 : vector<24x128xf32>
    %437 = arith.mulf %422, %434 : vector<24x128xf32>
    %438 = arith.addf %413, %437 : vector<24x128xf32>
    %439 = arith.mulf %424, %434 : vector<24x128xf32>
    %440 = arith.addf %415, %439 : vector<24x128xf32>
    %441 = vector.extract_strided_slice %6 {offsets = [17, 0], sizes = [1, 128], strides = [1, 1]} : vector<24x128xf32> to vector<1x128xf32>
    %442 = vector.extract_strided_slice %9 {offsets = [17, 0], sizes = [1, 128], strides = [1, 1]} : vector<24x128xf32> to vector<1x128xf32>
    %443 = vector.extract_strided_slice %12 {offsets = [17, 0], sizes = [1, 128], strides = [1, 1]} : vector<24x128xf32> to vector<1x128xf32>
    %444 = vector.broadcast %441 : vector<1x128xf32> to vector<24x128xf32>
    %445 = arith.subf %444, %6 : vector<24x128xf32>
    %446 = vector.broadcast %442 : vector<1x128xf32> to vector<24x128xf32>
    %447 = arith.subf %446, %9 : vector<24x128xf32>
    %448 = vector.broadcast %443 : vector<1x128xf32> to vector<24x128xf32>
    %449 = arith.subf %448, %12 : vector<24x128xf32>
    %450 = arith.mulf %445, %445 : vector<24x128xf32>
    %451 = arith.mulf %447, %447 : vector<24x128xf32>
    %452 = arith.addf %450, %451 : vector<24x128xf32>
    %453 = arith.mulf %449, %449 : vector<24x128xf32>
    %454 = arith.addf %452, %453 : vector<24x128xf32>
    %cst_23 = arith.constant 9.99999968E-21 : f32
    %455 = vector.broadcast %cst_23 : f32 to vector<24x128xf32>
    %456 = arith.maximumf %454, %455 : vector<24x128xf32>
    %457 = math.rsqrt %456 : vector<24x128xf32>
    %458 = arith.mulf %457, %457 : vector<24x128xf32>
    %459 = arith.mulf %458, %457 : vector<24x128xf32>
    %460 = arith.mulf %445, %459 : vector<24x128xf32>
    %461 = arith.addf %436, %460 : vector<24x128xf32>
    %462 = arith.mulf %447, %459 : vector<24x128xf32>
    %463 = arith.addf %438, %462 : vector<24x128xf32>
    %464 = arith.mulf %449, %459 : vector<24x128xf32>
    %465 = arith.addf %440, %464 : vector<24x128xf32>
    %466 = vector.extract_strided_slice %6 {offsets = [18, 0], sizes = [1, 128], strides = [1, 1]} : vector<24x128xf32> to vector<1x128xf32>
    %467 = vector.extract_strided_slice %9 {offsets = [18, 0], sizes = [1, 128], strides = [1, 1]} : vector<24x128xf32> to vector<1x128xf32>
    %468 = vector.extract_strided_slice %12 {offsets = [18, 0], sizes = [1, 128], strides = [1, 1]} : vector<24x128xf32> to vector<1x128xf32>
    %469 = vector.broadcast %466 : vector<1x128xf32> to vector<24x128xf32>
    %470 = arith.subf %469, %6 : vector<24x128xf32>
    %471 = vector.broadcast %467 : vector<1x128xf32> to vector<24x128xf32>
    %472 = arith.subf %471, %9 : vector<24x128xf32>
    %473 = vector.broadcast %468 : vector<1x128xf32> to vector<24x128xf32>
    %474 = arith.subf %473, %12 : vector<24x128xf32>
    %475 = arith.mulf %470, %470 : vector<24x128xf32>
    %476 = arith.mulf %472, %472 : vector<24x128xf32>
    %477 = arith.addf %475, %476 : vector<24x128xf32>
    %478 = arith.mulf %474, %474 : vector<24x128xf32>
    %479 = arith.addf %477, %478 : vector<24x128xf32>
    %cst_24 = arith.constant 9.99999968E-21 : f32
    %480 = vector.broadcast %cst_24 : f32 to vector<24x128xf32>
    %481 = arith.maximumf %479, %480 : vector<24x128xf32>
    %482 = math.rsqrt %481 : vector<24x128xf32>
    %483 = arith.mulf %482, %482 : vector<24x128xf32>
    %484 = arith.mulf %483, %482 : vector<24x128xf32>
    %485 = arith.mulf %470, %484 : vector<24x128xf32>
    %486 = arith.addf %461, %485 : vector<24x128xf32>
    %487 = arith.mulf %472, %484 : vector<24x128xf32>
    %488 = arith.addf %463, %487 : vector<24x128xf32>
    %489 = arith.mulf %474, %484 : vector<24x128xf32>
    %490 = arith.addf %465, %489 : vector<24x128xf32>
    %491 = vector.extract_strided_slice %6 {offsets = [19, 0], sizes = [1, 128], strides = [1, 1]} : vector<24x128xf32> to vector<1x128xf32>
    %492 = vector.extract_strided_slice %9 {offsets = [19, 0], sizes = [1, 128], strides = [1, 1]} : vector<24x128xf32> to vector<1x128xf32>
    %493 = vector.extract_strided_slice %12 {offsets = [19, 0], sizes = [1, 128], strides = [1, 1]} : vector<24x128xf32> to vector<1x128xf32>
    %494 = vector.broadcast %491 : vector<1x128xf32> to vector<24x128xf32>
    %495 = arith.subf %494, %6 : vector<24x128xf32>
    %496 = vector.broadcast %492 : vector<1x128xf32> to vector<24x128xf32>
    %497 = arith.subf %496, %9 : vector<24x128xf32>
    %498 = vector.broadcast %493 : vector<1x128xf32> to vector<24x128xf32>
    %499 = arith.subf %498, %12 : vector<24x128xf32>
    %500 = arith.mulf %495, %495 : vector<24x128xf32>
    %501 = arith.mulf %497, %497 : vector<24x128xf32>
    %502 = arith.addf %500, %501 : vector<24x128xf32>
    %503 = arith.mulf %499, %499 : vector<24x128xf32>
    %504 = arith.addf %502, %503 : vector<24x128xf32>
    %cst_25 = arith.constant 9.99999968E-21 : f32
    %505 = vector.broadcast %cst_25 : f32 to vector<24x128xf32>
    %506 = arith.maximumf %504, %505 : vector<24x128xf32>
    %507 = math.rsqrt %506 : vector<24x128xf32>
    %508 = arith.mulf %507, %507 : vector<24x128xf32>
    %509 = arith.mulf %508, %507 : vector<24x128xf32>
    %510 = arith.mulf %495, %509 : vector<24x128xf32>
    %511 = arith.addf %486, %510 : vector<24x128xf32>
    %512 = arith.mulf %497, %509 : vector<24x128xf32>
    %513 = arith.addf %488, %512 : vector<24x128xf32>
    %514 = arith.mulf %499, %509 : vector<24x128xf32>
    %515 = arith.addf %490, %514 : vector<24x128xf32>
    %516 = vector.extract_strided_slice %6 {offsets = [20, 0], sizes = [1, 128], strides = [1, 1]} : vector<24x128xf32> to vector<1x128xf32>
    %517 = vector.extract_strided_slice %9 {offsets = [20, 0], sizes = [1, 128], strides = [1, 1]} : vector<24x128xf32> to vector<1x128xf32>
    %518 = vector.extract_strided_slice %12 {offsets = [20, 0], sizes = [1, 128], strides = [1, 1]} : vector<24x128xf32> to vector<1x128xf32>
    %519 = vector.broadcast %516 : vector<1x128xf32> to vector<24x128xf32>
    %520 = arith.subf %519, %6 : vector<24x128xf32>
    %521 = vector.broadcast %517 : vector<1x128xf32> to vector<24x128xf32>
    %522 = arith.subf %521, %9 : vector<24x128xf32>
    %523 = vector.broadcast %518 : vector<1x128xf32> to vector<24x128xf32>
    %524 = arith.subf %523, %12 : vector<24x128xf32>
    %525 = arith.mulf %520, %520 : vector<24x128xf32>
    %526 = arith.mulf %522, %522 : vector<24x128xf32>
    %527 = arith.addf %525, %526 : vector<24x128xf32>
    %528 = arith.mulf %524, %524 : vector<24x128xf32>
    %529 = arith.addf %527, %528 : vector<24x128xf32>
    %cst_26 = arith.constant 9.99999968E-21 : f32
    %530 = vector.broadcast %cst_26 : f32 to vector<24x128xf32>
    %531 = arith.maximumf %529, %530 : vector<24x128xf32>
    %532 = math.rsqrt %531 : vector<24x128xf32>
    %533 = arith.mulf %532, %532 : vector<24x128xf32>
    %534 = arith.mulf %533, %532 : vector<24x128xf32>
    %535 = arith.mulf %520, %534 : vector<24x128xf32>
    %536 = arith.addf %511, %535 : vector<24x128xf32>
    %537 = arith.mulf %522, %534 : vector<24x128xf32>
    %538 = arith.addf %513, %537 : vector<24x128xf32>
    %539 = arith.mulf %524, %534 : vector<24x128xf32>
    %540 = arith.addf %515, %539 : vector<24x128xf32>
    %541 = vector.extract_strided_slice %6 {offsets = [21, 0], sizes = [1, 128], strides = [1, 1]} : vector<24x128xf32> to vector<1x128xf32>
    %542 = vector.extract_strided_slice %9 {offsets = [21, 0], sizes = [1, 128], strides = [1, 1]} : vector<24x128xf32> to vector<1x128xf32>
    %543 = vector.extract_strided_slice %12 {offsets = [21, 0], sizes = [1, 128], strides = [1, 1]} : vector<24x128xf32> to vector<1x128xf32>
    %544 = vector.broadcast %541 : vector<1x128xf32> to vector<24x128xf32>
    %545 = arith.subf %544, %6 : vector<24x128xf32>
    %546 = vector.broadcast %542 : vector<1x128xf32> to vector<24x128xf32>
    %547 = arith.subf %546, %9 : vector<24x128xf32>
    %548 = vector.broadcast %543 : vector<1x128xf32> to vector<24x128xf32>
    %549 = arith.subf %548, %12 : vector<24x128xf32>
    %550 = arith.mulf %545, %545 : vector<24x128xf32>
    %551 = arith.mulf %547, %547 : vector<24x128xf32>
    %552 = arith.addf %550, %551 : vector<24x128xf32>
    %553 = arith.mulf %549, %549 : vector<24x128xf32>
    %554 = arith.addf %552, %553 : vector<24x128xf32>
    %cst_27 = arith.constant 9.99999968E-21 : f32
    %555 = vector.broadcast %cst_27 : f32 to vector<24x128xf32>
    %556 = arith.maximumf %554, %555 : vector<24x128xf32>
    %557 = math.rsqrt %556 : vector<24x128xf32>
    %558 = arith.mulf %557, %557 : vector<24x128xf32>
    %559 = arith.mulf %558, %557 : vector<24x128xf32>
    %560 = arith.mulf %545, %559 : vector<24x128xf32>
    %561 = arith.addf %536, %560 : vector<24x128xf32>
    %562 = arith.mulf %547, %559 : vector<24x128xf32>
    %563 = arith.addf %538, %562 : vector<24x128xf32>
    %564 = arith.mulf %549, %559 : vector<24x128xf32>
    %565 = arith.addf %540, %564 : vector<24x128xf32>
    %566 = vector.extract_strided_slice %6 {offsets = [22, 0], sizes = [1, 128], strides = [1, 1]} : vector<24x128xf32> to vector<1x128xf32>
    %567 = vector.extract_strided_slice %9 {offsets = [22, 0], sizes = [1, 128], strides = [1, 1]} : vector<24x128xf32> to vector<1x128xf32>
    %568 = vector.extract_strided_slice %12 {offsets = [22, 0], sizes = [1, 128], strides = [1, 1]} : vector<24x128xf32> to vector<1x128xf32>
    %569 = vector.broadcast %566 : vector<1x128xf32> to vector<24x128xf32>
    %570 = arith.subf %569, %6 : vector<24x128xf32>
    %571 = vector.broadcast %567 : vector<1x128xf32> to vector<24x128xf32>
    %572 = arith.subf %571, %9 : vector<24x128xf32>
    %573 = vector.broadcast %568 : vector<1x128xf32> to vector<24x128xf32>
    %574 = arith.subf %573, %12 : vector<24x128xf32>
    %575 = arith.mulf %570, %570 : vector<24x128xf32>
    %576 = arith.mulf %572, %572 : vector<24x128xf32>
    %577 = arith.addf %575, %576 : vector<24x128xf32>
    %578 = arith.mulf %574, %574 : vector<24x128xf32>
    %579 = arith.addf %577, %578 : vector<24x128xf32>
    %cst_28 = arith.constant 9.99999968E-21 : f32
    %580 = vector.broadcast %cst_28 : f32 to vector<24x128xf32>
    %581 = arith.maximumf %579, %580 : vector<24x128xf32>
    %582 = math.rsqrt %581 : vector<24x128xf32>
    %583 = arith.mulf %582, %582 : vector<24x128xf32>
    %584 = arith.mulf %583, %582 : vector<24x128xf32>
    %585 = arith.mulf %570, %584 : vector<24x128xf32>
    %586 = arith.addf %561, %585 : vector<24x128xf32>
    %587 = arith.mulf %572, %584 : vector<24x128xf32>
    %588 = arith.addf %563, %587 : vector<24x128xf32>
    %589 = arith.mulf %574, %584 : vector<24x128xf32>
    %590 = arith.addf %565, %589 : vector<24x128xf32>
    %591 = vector.extract_strided_slice %6 {offsets = [23, 0], sizes = [1, 128], strides = [1, 1]} : vector<24x128xf32> to vector<1x128xf32>
    %592 = vector.extract_strided_slice %9 {offsets = [23, 0], sizes = [1, 128], strides = [1, 1]} : vector<24x128xf32> to vector<1x128xf32>
    %593 = vector.extract_strided_slice %12 {offsets = [23, 0], sizes = [1, 128], strides = [1, 1]} : vector<24x128xf32> to vector<1x128xf32>
    %594 = vector.broadcast %591 : vector<1x128xf32> to vector<24x128xf32>
    %595 = arith.subf %594, %6 : vector<24x128xf32>
    %596 = vector.broadcast %592 : vector<1x128xf32> to vector<24x128xf32>
    %597 = arith.subf %596, %9 : vector<24x128xf32>
    %598 = vector.broadcast %593 : vector<1x128xf32> to vector<24x128xf32>
    %599 = arith.subf %598, %12 : vector<24x128xf32>
    %600 = arith.mulf %595, %595 : vector<24x128xf32>
    %601 = arith.mulf %597, %597 : vector<24x128xf32>
    %602 = arith.addf %600, %601 : vector<24x128xf32>
    %603 = arith.mulf %599, %599 : vector<24x128xf32>
    %604 = arith.addf %602, %603 : vector<24x128xf32>
    %cst_29 = arith.constant 9.99999968E-21 : f32
    %605 = vector.broadcast %cst_29 : f32 to vector<24x128xf32>
    %606 = arith.maximumf %604, %605 : vector<24x128xf32>
    %607 = math.rsqrt %606 : vector<24x128xf32>
    %608 = arith.mulf %607, %607 : vector<24x128xf32>
    %609 = arith.mulf %608, %607 : vector<24x128xf32>
    %610 = arith.mulf %595, %609 : vector<24x128xf32>
    %611 = arith.addf %586, %610 : vector<24x128xf32>
    %612 = arith.mulf %597, %609 : vector<24x128xf32>
    %613 = arith.addf %588, %612 : vector<24x128xf32>
    %614 = arith.mulf %599, %609 : vector<24x128xf32>
    %615 = arith.addf %590, %614 : vector<24x128xf32>
    %c0_30 = arith.constant 0 : index
    %c0_31 = arith.constant 0 : index
    %616 = arith.index_cast %3 : i32 to index
    %617 = vector.load %arg2[%c0_30, %c0_31, %616] : memref<3x24x128xf32, #tpu.memory_space<vmem>>, vector<1x24x128xf32>
    %618 = vector.shape_cast %617 : vector<1x24x128xf32> to vector<24x128xf32>
    %619 = vector.shape_cast %611 : vector<24x128xf32> to vector<1x24x128xf32>
    tpu.vector_store %arg2[%c0_30, %c0_31, %616], %619 {strides = array<i32>} : memref<3x24x128xf32, #tpu.memory_space<vmem>>, vector<1x24x128xf32>,
    %c1_32 = arith.constant 1 : index
    %c0_33 = arith.constant 0 : index
    %620 = arith.index_cast %3 : i32 to index
    %621 = vector.load %arg2[%c1_32, %c0_33, %620] : memref<3x24x128xf32, #tpu.memory_space<vmem>>, vector<1x24x128xf32>
    %622 = vector.shape_cast %621 : vector<1x24x128xf32> to vector<24x128xf32>
    %623 = vector.shape_cast %613 : vector<24x128xf32> to vector<1x24x128xf32>
    tpu.vector_store %arg2[%c1_32, %c0_33, %620], %623 {strides = array<i32>} : memref<3x24x128xf32, #tpu.memory_space<vmem>>, vector<1x24x128xf32>,
    %c2_34 = arith.constant 2 : index
    %c0_35 = arith.constant 0 : index
    %624 = arith.index_cast %3 : i32 to index
    %625 = vector.load %arg2[%c2_34, %c0_35, %624] : memref<3x24x128xf32, #tpu.memory_space<vmem>>, vector<1x24x128xf32>
    %626 = vector.shape_cast %625 : vector<1x24x128xf32> to vector<24x128xf32>
    %627 = vector.shape_cast %615 : vector<24x128xf32> to vector<1x24x128xf32>
    tpu.vector_store %arg2[%c2_34, %c0_35, %624], %627 {strides = array<i32>} : memref<3x24x128xf32, #tpu.memory_space<vmem>>, vector<1x24x128xf32>,
    %c1_i32_36 = arith.constant 1 : i32
    return
  }
  func.func @transform_0(%arg0: i32) -> (i32, i32, i32) {
    %c0_i32 = arith.constant 0 : i32
    %c0_i32_0 = arith.constant 0 : i32
    %c0_i32_1 = arith.constant 0 : i32
    return %c0_i32, %c0_i32_0, %arg0 : i32, i32, i32
  }
  func.func @transform_1(%arg0: i32) -> (i32, i32, i32) {
    %c0_i32 = arith.constant 0 : i32
    %c0_i32_0 = arith.constant 0 : i32
    %c0_i32_1 = arith.constant 0 : i32
    return %c0_i32, %c0_i32_0, %arg0 : i32, i32, i32
  }
}

</mosaic_0001>

<llo_original>
// kernel: manybody3d_forward.1
$region0: #{manybody3d_forward.1}
  #allocation0 [shape = 'u32[]', space=smem, size = 0x4, offset = 0x4, fixed_abs, tag = 'smem constant byte address 0x4 - core index']
  #allocation1 [shape = 'u32[144,128]{1,0:T(1,128)}', space=vmem, size = 0x12000, scoped, tag = 'internal scratch']
  %s0 = inlined_call_operand.vmem [shape: f32[3,24,128], index: 0, kind: input, shape index: {}]
  %s1 = inlined_call_operand.vmem [shape: f32[3,24,128], index: 1, kind: output, shape index: {}]
  %s2 = sld [smem:[#allocation0]]
  $region14: #{manybody3d_forward.1} parent=0
    _
  %s4 = ssub.s32 1, %s2
  %s5 = scalar_select 0, %s4, %s2
  // Predicated region
  $region2: #{manybody3d_forward.1} parent=0 // pred_check
    _
  $region3: #{manybody3d_forward.1} parent=0 // pred_check_branch
    %7 = sbr.rel (0) target = $region5
  $region4: #{manybody3d_forward.1} parent=0 // pred_region
    _
  $region5: #{manybody3d_forward.1} parent=0 // pred_fallthru
    _
  %v8 = vld [vmem:[%s0] sm:$0xff]
  %v9 = vld [vmem:[%s0 + $0x8] sm:$0xff]
  %v10 = vld [vmem:[%s0 + $0x10] sm:$0xff]
  %s11 = sadd.s32 0, 24
  %s12 = scalar_lea.vmem %s0, %s11
  %v13 = vld [vmem:[%s12] sm:$0xff]
  %v14 = vld [vmem:[%s12 + $0x8] sm:$0xff]
  %v15 = vld [vmem:[%s12 + $0x10] sm:$0xff]
  %s16 = sadd.s32 0, 48
  %s17 = scalar_lea.vmem %s0, %s16
  %v18 = vld [vmem:[%s17] sm:$0xff]
  %v19 = vld [vmem:[%s17 + $0x8] sm:$0xff]
  %v20 = vld [vmem:[%s17 + $0x10] sm:$0xff]
  %v21 = vlaneseq
  %v22 = vshrl.u32 %v21, 7
  %v23 = vsub.s32 0, %v22
  %v24 = vrot.slane %v8, %v23
  %v25 = vsub.f32 %v24, %v8
  %v26 = vsub.f32 %v24, %v9
  %v27 = vsub.f32 %v24, %v10
  %v28 = vlaneseq
  %v29 = vshrl.u32 %v28, 7
  %v30 = vsub.s32 0, %v29
  %v31 = vrot.slane %v13, %v30
  %v32 = vsub.f32 %v31, %v13
  %v33 = vsub.f32 %v31, %v14
  %v34 = vsub.f32 %v31, %v15
  %v35 = vlaneseq
  %v36 = vshrl.u32 %v35, 7
  %v37 = vsub.s32 0, %v36
  %v38 = vrot.slane %v18, %v37
  %v39 = vsub.f32 %v38, %v18
  %v40 = vsub.f32 %v38, %v19
  %v41 = vsub.f32 %v38, %v20
  %v42 = vmul.f32 %v25, %v25
  %v43 = vmul.f32 %v26, %v26
  %v44 = vmul.f32 %v27, %v27
  %v45 = vmul.f32 %v32, %v32
  %v46 = vmul.f32 %v33, %v33
  %v47 = vmul.f32 %v34, %v34
  %v48 = vadd.f32 %v42, %v45
  %v49 = vadd.f32 %v43, %v46
  %v50 = vadd.f32 %v44, %v47
  %v51 = vmul.f32 %v39, %v39
  %v52 = vmul.f32 %v40, %v40
  %v53 = vmul.f32 %v41, %v41
  %v54 = vadd.f32 %v48, %v51
  %v55 = vadd.f32 %v49, %v52
  %v56 = vadd.f32 %v50, %v53
  %v57 = vmax.f32 %v54, 1e-20
  %v58 = vmax.f32 %v55, 1e-20
  %v59 = vmax.f32 %v56, 1e-20
  %v60 = vrsqrt.pop %v57
  %v61 = vrsqrt.pop %v58
  %v62 = vrsqrt.pop %v59
  %v63 = vmul.f32 %v60, %v60
  %v64 = vmul.f32 %v61, %v61
  %v65 = vmul.f32 %v62, %v62
  %v66 = vmul.f32 %v63, %v60
  %v67 = vmul.f32 %v64, %v61
  %v68 = vmul.f32 %v65, %v62
  %v69 = vmul.f32 %v25, %v66
  %v70 = vmul.f32 %v26, %v67
  %v71 = vmul.f32 %v27, %v68
  %v72 = vadd.f32 %v69, 0.0
  %v73 = vadd.f32 %v70, 0.0
  %v74 = vadd.f32 %v71, 0.0
  %v75 = vmul.f32 %v32, %v66
  %v76 = vmul.f32 %v33, %v67
  %v77 = vmul.f32 %v34, %v68
  %v78 = vadd.f32 %v75, 0.0
  %v79 = vadd.f32 %v76, 0.0
  %v80 = vadd.f32 %v77, 0.0
  %v81 = vmul.f32 %v39, %v66
  %v82 = vmul.f32 %v40, %v67
  %v83 = vmul.f32 %v41, %v68
  %v84 = vadd.f32 %v81, 0.0
  %v85 = vadd.f32 %v82, 0.0
  %v86 = vadd.f32 %v83, 0.0
  %v87 = vlaneseq
  %v88 = vshrl.u32 %v87, 7
  %v89 = vsub.s32 1, %v88
  %v90 = vrot.slane %v8, %v89
  %v91 = vsub.f32 %v90, %v8
  %v92 = vsub.f32 %v90, %v9
  %v93 = vsub.f32 %v90, %v10
  %v94 = vlaneseq
  %v95 = vshrl.u32 %v94, 7
  %v96 = vsub.s32 1, %v95
  %v97 = vrot.slane %v13, %v96
  %v98 = vsub.f32 %v97, %v13
  %v99 = vsub.f32 %v97, %v14
  %v100 = vsub.f32 %v97, %v15
  %v101 = vlaneseq
  %v102 = vshrl.u32 %v101, 7
  %v103 = vsub.s32 1, %v102
  %v104 = vrot.slane %v18, %v103
  %v105 = vsub.f32 %v104, %v18
  %v106 = vsub.f32 %v104, %v19
  %v107 = vsub.f32 %v104, %v20
  %v108 = vmul.f32 %v91, %v91
  %v109 = vmul.f32 %v92, %v92
  %v110 = vmul.f32 %v93, %v93
  %v111 = vmul.f32 %v98, %v98
  %v112 = vmul.f32 %v99, %v99
  %v113 = vmul.f32 %v100, %v100
  %v114 = vadd.f32 %v108, %v111
  %v115 = vadd.f32 %v109, %v112
  %v116 = vadd.f32 %v110, %v113
  %v117 = vmul.f32 %v105, %v105
  %v118 = vmul.f32 %v106, %v106
  %v119 = vmul.f32 %v107, %v107
  %v120 = vadd.f32 %v114, %v117
  %v121 = vadd.f32 %v115, %v118
  %v122 = vadd.f32 %v116, %v119
  %v123 = vmax.f32 %v120, 1e-20
  %v124 = vmax.f32 %v121, 1e-20
  %v125 = vmax.f32 %v122, 1e-20
  %v126 = vrsqrt.pop %v123
  %v127 = vrsqrt.pop %v124
  %v128 = vrsqrt.pop %v125
  %v129 = vmul.f32 %v126, %v126
  %v130 = vmul.f32 %v127, %v127
  %v131 = vmul.f32 %v128, %v128
  %v132 = vmul.f32 %v129, %v126
  %v133 = vmul.f32 %v130, %v127
  %v134 = vmul.f32 %v131, %v128
  %v135 = vmul.f32 %v91, %v132
  %v136 = vmul.f32 %v92, %v133
  %v137 = vmul.f32 %v93, %v134
  %v138 = vadd.f32 %v72, %v135
  %v139 = vadd.f32 %v73, %v136
  %v140 = vadd.f32 %v74, %v137
  %v141 = vmul.f32 %v98, %v132
  %v142 = vmul.f32 %v99, %v133
  %v143 = vmul.f32 %v100, %v134
  %v144 = vadd.f32 %v78, %v141
  %v145 = vadd.f32 %v79, %v142
  %v146 = vadd.f32 %v80, %v143
  %v147 = vmul.f32 %v105, %v132
  %v148 = vmul.f32 %v106, %v133
  %v149 = vmul.f32 %v107, %v134
  %v150 = vadd.f32 %v84, %v147
  %v151 = vadd.f32 %v85, %v148
  %v152 = vadd.f32 %v86, %v149
  %v153 = vlaneseq
  %v154 = vshrl.u32 %v153, 7
  %v155 = vsub.s32 2, %v154
  %v156 = vrot.slane %v8, %v155
  %v157 = vsub.f32 %v156, %v8
  %v158 = vsub.f32 %v156, %v9
  %v159 = vsub.f32 %v156, %v10
  %v160 = vlaneseq
  %v161 = vshrl.u32 %v160, 7
  %v162 = vsub.s32 2, %v161
  %v163 = vrot.slane %v13, %v162
  %v164 = vsub.f32 %v163, %v13
  %v165 = vsub.f32 %v163, %v14
  %v166 = vsub.f32 %v163, %v15
  %v167 = vlaneseq
  %v168 = vshrl.u32 %v167, 7
  %v169 = vsub.s32 2, %v168
  %v170 = vrot.slane %v18, %v169
  %v171 = vsub.f32 %v170, %v18
  %v172 = vsub.f32 %v170, %v19
  %v173 = vsub.f32 %v170, %v20
  %v174 = vmul.f32 %v157, %v157
  %v175 = vmul.f32 %v158, %v158
  %v176 = vmul.f32 %v159, %v159
  %v177 = vmul.f32 %v164, %v164
  %v178 = vmul.f32 %v165, %v165
  %v179 = vmul.f32 %v166, %v166
  %v180 = vadd.f32 %v174, %v177
  %v181 = vadd.f32 %v175, %v178
  %v182 = vadd.f32 %v176, %v179
  %v183 = vmul.f32 %v171, %v171
  %v184 = vmul.f32 %v172, %v172
  %v185 = vmul.f32 %v173, %v173
  %v186 = vadd.f32 %v180, %v183
  %v187 = vadd.f32 %v181, %v184
  %v188 = vadd.f32 %v182, %v185
  %v189 = vmax.f32 %v186, 1e-20
  %v190 = vmax.f32 %v187, 1e-20
  %v191 = vmax.f32 %v188, 1e-20
  %v192 = vrsqrt.pop %v189
  %v193 = vrsqrt.pop %v190
  %v194 = vrsqrt.pop %v191
  %v195 = vmul.f32 %v192, %v192
  %v196 = vmul.f32 %v193, %v193
  %v197 = vmul.f32 %v194, %v194
  %v198 = vmul.f32 %v195, %v192
  %v199 = vmul.f32 %v196, %v193
  %v200 = vmul.f32 %v197, %v194
  %v201 = vmul.f32 %v157, %v198
  %v202 = vmul.f32 %v158, %v199
  %v203 = vmul.f32 %v159, %v200
  %v204 = vadd.f32 %v138, %v201
  %v205 = vadd.f32 %v139, %v202
  %v206 = vadd.f32 %v140, %v203
  %v207 = vmul.f32 %v164, %v198
  %v208 = vmul.f32 %v165, %v199
  %v209 = vmul.f32 %v166, %v200
  %v210 = vadd.f32 %v144, %v207
  %v211 = vadd.f32 %v145, %v208
  %v212 = vadd.f32 %v146, %v209
  %v213 = vmul.f32 %v171, %v198
  %v214 = vmul.f32 %v172, %v199
  %v215 = vmul.f32 %v173, %v200
  %v216 = vadd.f32 %v150, %v213
  %v217 = vadd.f32 %v151, %v214
  %v218 = vadd.f32 %v152, %v215
  %v219 = vlaneseq
  %v220 = vshrl.u32 %v219, 7
  %v221 = vsub.s32 3, %v220
  %v222 = vrot.slane %v8, %v221
  %v223 = vsub.f32 %v222, %v8
  %v224 = vsub.f32 %v222, %v9
  %v225 = vsub.f32 %v222, %v10
  %v226 = vlaneseq
  %v227 = vshrl.u32 %v226, 7
  %v228 = vsub.s32 3, %v227
  %v229 = vrot.slane %v13, %v228
  %v230 = vsub.f32 %v229, %v13
  %v231 = vsub.f32 %v229, %v14
  %v232 = vsub.f32 %v229, %v15
  %v233 = vlaneseq
  %v234 = vshrl.u32 %v233, 7
  %v235 = vsub.s32 3, %v234
  %v236 = vrot.slane %v18, %v235
  %v237 = vsub.f32 %v236, %v18
  %v238 = vsub.f32 %v236, %v19
  %v239 = vsub.f32 %v236, %v20
  %v240 = vmul.f32 %v223, %v223
  %v241 = vmul.f32 %v224, %v224
  %v242 = vmul.f32 %v225, %v225
  %v243 = vmul.f32 %v230, %v230
  %v244 = vmul.f32 %v231, %v231
  %v245 = vmul.f32 %v232, %v232
  %v246 = vadd.f32 %v240, %v243
  %v247 = vadd.f32 %v241, %v244
  %v248 = vadd.f32 %v242, %v245
  %v249 = vmul.f32 %v237, %v237
  %v250 = vmul.f32 %v238, %v238
  %v251 = vmul.f32 %v239, %v239
  %v252 = vadd.f32 %v246, %v249
  %v253 = vadd.f32 %v247, %v250
  %v254 = vadd.f32 %v248, %v251
  %v255 = vmax.f32 %v252, 1e-20
  %v256 = vmax.f32 %v253, 1e-20
  %v257 = vmax.f32 %v254, 1e-20
  %v258 = vrsqrt.pop %v255
  %v259 = vrsqrt.pop %v256
  %v260 = vrsqrt.pop %v257
  %v261 = vmul.f32 %v258, %v258
  %v262 = vmul.f32 %v259, %v259
  %v263 = vmul.f32 %v260, %v260
  %v264 = vmul.f32 %v261, %v258
  %v265 = vmul.f32 %v262, %v259
  %v266 = vmul.f32 %v263, %v260
  %v267 = vmul.f32 %v223, %v264
  %v268 = vmul.f32 %v224, %v265
  %v269 = vmul.f32 %v225, %v266
  %v270 = vadd.f32 %v204, %v267
  %v271 = vadd.f32 %v205, %v268
  %v272 = vadd.f32 %v206, %v269
  %v273 = vmul.f32 %v230, %v264
  %v274 = vmul.f32 %v231, %v265
  %v275 = vmul.f32 %v232, %v266
  %v276 = vadd.f32 %v210, %v273
  %v277 = vadd.f32 %v211, %v274
  %v278 = vadd.f32 %v212, %v275
  %v279 = vmul.f32 %v237, %v264
  %v280 = vmul.f32 %v238, %v265
  %v281 = vmul.f32 %v239, %v266
  %v282 = vadd.f32 %v216, %v279
  %v283 = vadd.f32 %v217, %v280
  %v284 = vadd.f32 %v218, %v281
  %v285 = vlaneseq
  %v286 = vshrl.u32 %v285, 7
  %v287 = vsub.s32 4, %v286
  %v288 = vrot.slane %v8, %v287
  %v289 = vsub.f32 %v288, %v8
  %v290 = vsub.f32 %v288, %v9
  %v291 = vsub.f32 %v288, %v10
  %v292 = vlaneseq
  %v293 = vshrl.u32 %v292, 7
  %v294 = vsub.s32 4, %v293
  %v295 = vrot.slane %v13, %v294
  %v296 = vsub.f32 %v295, %v13
  %v297 = vsub.f32 %v295, %v14
  %v298 = vsub.f32 %v295, %v15
  %v299 = vlaneseq
  %v300 = vshrl.u32 %v299, 7
  %v301 = vsub.s32 4, %v300
  %v302 = vrot.slane %v18, %v301
  %v303 = vsub.f32 %v302, %v18
  %v304 = vsub.f32 %v302, %v19
  %v305 = vsub.f32 %v302, %v20
  %v306 = vmul.f32 %v289, %v289
  %v307 = vmul.f32 %v290, %v290
  %v308 = vmul.f32 %v291, %v291
  %v309 = vmul.f32 %v296, %v296
  %v310 = vmul.f32 %v297, %v297
  %v311 = vmul.f32 %v298, %v298
  %v312 = vadd.f32 %v306, %v309
  %v313 = vadd.f32 %v307, %v310
  %v314 = vadd.f32 %v308, %v311
  %v315 = vmul.f32 %v303, %v303
  %v316 = vmul.f32 %v304, %v304
  %v317 = vmul.f32 %v305, %v305
  %v318 = vadd.f32 %v312, %v315
  %v319 = vadd.f32 %v313, %v316
  %v320 = vadd.f32 %v314, %v317
  %v321 = vmax.f32 %v318, 1e-20
  %v322 = vmax.f32 %v319, 1e-20
  %v323 = vmax.f32 %v320, 1e-20
  %v324 = vrsqrt.pop %v321
  %v325 = vrsqrt.pop %v322
  %v326 = vrsqrt.pop %v323
  %v327 = vmul.f32 %v324, %v324
  %v328 = vmul.f32 %v325, %v325
  %v329 = vmul.f32 %v326, %v326
  %v330 = vmul.f32 %v327, %v324
  %v331 = vmul.f32 %v328, %v325
  %v332 = vmul.f32 %v329, %v326
  %v333 = vmul.f32 %v289, %v330
  %v334 = vmul.f32 %v290, %v331
  %v335 = vmul.f32 %v291, %v332
  %v336 = vadd.f32 %v270, %v333
  %v337 = vadd.f32 %v271, %v334
  %v338 = vadd.f32 %v272, %v335
  %v339 = vmul.f32 %v296, %v330
  %v340 = vmul.f32 %v297, %v331
  %v341 = vmul.f32 %v298, %v332
  %v342 = vadd.f32 %v276, %v339
  %v343 = vadd.f32 %v277, %v340
  %v344 = vadd.f32 %v278, %v341
  %v345 = vmul.f32 %v303, %v330
  %v346 = vmul.f32 %v304, %v331
  %v347 = vmul.f32 %v305, %v332
  %v348 = vadd.f32 %v282, %v345
  %v349 = vadd.f32 %v283, %v346
  %v350 = vadd.f32 %v284, %v347
  %v351 = vlaneseq
  %v352 = vshrl.u32 %v351, 7
  %v353 = vsub.s32 5, %v352
  %v354 = vrot.slane %v8, %v353
  %v355 = vsub.f32 %v354, %v8
  %v356 = vsub.f32 %v354, %v9
  %v357 = vsub.f32 %v354, %v10
  %v358 = vlaneseq
  %v359 = vshrl.u32 %v358, 7
  %v360 = vsub.s32 5, %v359
  %v361 = vrot.slane %v13, %v360
  %v362 = vsub.f32 %v361, %v13
  %v363 = vsub.f32 %v361, %v14
  %v364 = vsub.f32 %v361, %v15
  %v365 = vlaneseq
  %v366 = vshrl.u32 %v365, 7
  %v367 = vsub.s32 5, %v366
  %v368 = vrot.slane %v18, %v367
  %v369 = vsub.f32 %v368, %v18
  %v370 = vsub.f32 %v368, %v19
  %v371 = vsub.f32 %v368, %v20
  %v372 = vmul.f32 %v355, %v355
  %v373 = vmul.f32 %v356, %v356
  %v374 = vmul.f32 %v357, %v357
  %v375 = vmul.f32 %v362, %v362
  %v376 = vmul.f32 %v363, %v363
  %v377 = vmul.f32 %v364, %v364
  %v378 = vadd.f32 %v372, %v375
  %v379 = vadd.f32 %v373, %v376
  %v380 = vadd.f32 %v374, %v377
  %v381 = vmul.f32 %v369, %v369
  %v382 = vmul.f32 %v370, %v370
  %v383 = vmul.f32 %v371, %v371
  %v384 = vadd.f32 %v378, %v381
  %v385 = vadd.f32 %v379, %v382
  %v386 = vadd.f32 %v380, %v383
  %v387 = vmax.f32 %v384, 1e-20
  %v388 = vmax.f32 %v385, 1e-20
  %v389 = vmax.f32 %v386, 1e-20
  %v390 = vrsqrt.pop %v387
  %v391 = vrsqrt.pop %v388
  %v392 = vrsqrt.pop %v389
  %v393 = vmul.f32 %v390, %v390
  %v394 = vmul.f32 %v391, %v391
  %v395 = vmul.f32 %v392, %v392
  %v396 = vmul.f32 %v393, %v390
  %v397 = vmul.f32 %v394, %v391
  %v398 = vmul.f32 %v395, %v392
  %v399 = vmul.f32 %v355, %v396
  %v400 = vmul.f32 %v356, %v397
  %v401 = vmul.f32 %v357, %v398
  %v402 = vadd.f32 %v336, %v399
  %v403 = vadd.f32 %v337, %v400
  %v404 = vadd.f32 %v338, %v401
  %v405 = vmul.f32 %v362, %v396
  %v406 = vmul.f32 %v363, %v397
  %v407 = vmul.f32 %v364, %v398
  %v408 = vadd.f32 %v342, %v405
  %v409 = vadd.f32 %v343, %v406
  %v410 = vadd.f32 %v344, %v407
  %v411 = vmul.f32 %v369, %v396
  %v412 = vmul.f32 %v370, %v397
  %v413 = vmul.f32 %v371, %v398
  %v414 = vadd.f32 %v348, %v411
  %v415 = vadd.f32 %v349, %v412
  %v416 = vadd.f32 %v350, %v413
  %v417 = vlaneseq
  %v418 = vshrl.u32 %v417, 7
  %v419 = vsub.s32 6, %v418
  %v420 = vrot.slane %v8, %v419
  %v421 = vsub.f32 %v420, %v8
  %v422 = vsub.f32 %v420, %v9
  %v423 = vsub.f32 %v420, %v10
  %v424 = vlaneseq
  %v425 = vshrl.u32 %v424, 7
  %v426 = vsub.s32 6, %v425
  %v427 = vrot.slane %v13, %v426
  %v428 = vsub.f32 %v427, %v13
  %v429 = vsub.f32 %v427, %v14
  %v430 = vsub.f32 %v427, %v15
  %v431 = vlaneseq
  %v432 = vshrl.u32 %v431, 7
  %v433 = vsub.s32 6, %v432
  %v434 = vrot.slane %v18, %v433
  %v435 = vsub.f32 %v434, %v18
  %v436 = vsub.f32 %v434, %v19
  %v437 = vsub.f32 %v434, %v20
  %v438 = vmul.f32 %v421, %v421
  %v439 = vmul.f32 %v422, %v422
  %v440 = vmul.f32 %v423, %v423
  %v441 = vmul.f32 %v428, %v428
  %v442 = vmul.f32 %v429, %v429
  %v443 = vmul.f32 %v430, %v430
  %v444 = vadd.f32 %v438, %v441
  %v445 = vadd.f32 %v439, %v442
  %v446 = vadd.f32 %v440, %v443
  %v447 = vmul.f32 %v435, %v435
  %v448 = vmul.f32 %v436, %v436
  %v449 = vmul.f32 %v437, %v437
  %v450 = vadd.f32 %v444, %v447
  %v451 = vadd.f32 %v445, %v448
  %v452 = vadd.f32 %v446, %v449
  %v453 = vmax.f32 %v450, 1e-20
  %v454 = vmax.f32 %v451, 1e-20
  %v455 = vmax.f32 %v452, 1e-20
  %v456 = vrsqrt.pop %v453
  %v457 = vrsqrt.pop %v454
  %v458 = vrsqrt.pop %v455
  %v459 = vmul.f32 %v456, %v456
  %v460 = vmul.f32 %v457, %v457
  %v461 = vmul.f32 %v458, %v458
  %v462 = vmul.f32 %v459, %v456
  %v463 = vmul.f32 %v460, %v457
  %v464 = vmul.f32 %v461, %v458
  %v465 = vmul.f32 %v421, %v462
  %v466 = vmul.f32 %v422, %v463
  %v467 = vmul.f32 %v423, %v464
  %v468 = vadd.f32 %v402, %v465
  %v469 = vadd.f32 %v403, %v466
  %v470 = vadd.f32 %v404, %v467
  %v471 = vmul.f32 %v428, %v462
  %v472 = vmul.f32 %v429, %v463
  %v473 = vmul.f32 %v430, %v464
  %v474 = vadd.f32 %v408, %v471
  %v475 = vadd.f32 %v409, %v472
  %v476 = vadd.f32 %v410, %v473
  %v477 = vmul.f32 %v435, %v462
  %v478 = vmul.f32 %v436, %v463
  %v479 = vmul.f32 %v437, %v464
  %v480 = vadd.f32 %v414, %v477
  %v481 = vadd.f32 %v415, %v478
  %v482 = vadd.f32 %v416, %v479
  %v483 = vlaneseq
  %v484 = vshrl.u32 %v483, 7
  %v485 = vsub.s32 7, %v484
  %v486 = vrot.slane %v8, %v485
  %v487 = vsub.f32 %v486, %v8
  %v488 = vsub.f32 %v486, %v9
  %v489 = vsub.f32 %v486, %v10
  %v490 = vlaneseq
  %v491 = vshrl.u32 %v490, 7
  %v492 = vsub.s32 7, %v491
  %v493 = vrot.slane %v13, %v492
  %v494 = vsub.f32 %v493, %v13
  %v495 = vsub.f32 %v493, %v14
  %v496 = vsub.f32 %v493, %v15
  %v497 = vlaneseq
  %v498 = vshrl.u32 %v497, 7
  %v499 = vsub.s32 7, %v498
  %v500 = vrot.slane %v18, %v499
  %v501 = vsub.f32 %v500, %v18
  %v502 = vsub.f32 %v500, %v19
  %v503 = vsub.f32 %v500, %v20
  %v504 = vmul.f32 %v487, %v487
  %v505 = vmul.f32 %v488, %v488
  %v506 = vmul.f32 %v489, %v489
  %v507 = vmul.f32 %v494, %v494
  %v508 = vmul.f32 %v495, %v495
  %v509 = vmul.f32 %v496, %v496
  %v510 = vadd.f32 %v504, %v507
  %v511 = vadd.f32 %v505, %v508
  %v512 = vadd.f32 %v506, %v509
  %v513 = vmul.f32 %v501, %v501
  %v514 = vmul.f32 %v502, %v502
  %v515 = vmul.f32 %v503, %v503
  %v516 = vadd.f32 %v510, %v513
  %v517 = vadd.f32 %v511, %v514
  %v518 = vadd.f32 %v512, %v515
  %v519 = vmax.f32 %v516, 1e-20
  %v520 = vmax.f32 %v517, 1e-20
  %v521 = vmax.f32 %v518, 1e-20
  %v522 = vrsqrt.pop %v519
  %v523 = vrsqrt.pop %v520
  %v524 = vrsqrt.pop %v521
  %v525 = vmul.f32 %v522, %v522
  %v526 = vmul.f32 %v523, %v523
  %v527 = vmul.f32 %v524, %v524
  %v528 = vmul.f32 %v525, %v522
  %v529 = vmul.f32 %v526, %v523
  %v530 = vmul.f32 %v527, %v524
  %v531 = vmul.f32 %v487, %v528
  %v532 = vmul.f32 %v488, %v529
  %v533 = vmul.f32 %v489, %v530
  %v534 = vadd.f32 %v468, %v531
  %v535 = vadd.f32 %v469, %v532
  %v536 = vadd.f32 %v470, %v533
  %v537 = vmul.f32 %v494, %v528
  %v538 = vmul.f32 %v495, %v529
  %v539 = vmul.f32 %v496, %v530
  %v540 = vadd.f32 %v474, %v537
  %v541 = vadd.f32 %v475, %v538
  %v542 = vadd.f32 %v476, %v539
  %v543 = vmul.f32 %v501, %v528
  %v544 = vmul.f32 %v502, %v529
  %v545 = vmul.f32 %v503, %v530
  %v546 = vadd.f32 %v480, %v543
  %v547 = vadd.f32 %v481, %v544
  %v548 = vadd.f32 %v482, %v545
  %v549 = vlaneseq
  %v550 = vshrl.u32 %v549, 7
  %v551 = vsub.s32 0, %v550
  %v552 = vrot.slane %v9, %v551
  %v553 = vsub.f32 %v552, %v8
  %v554 = vsub.f32 %v552, %v9
  %v555 = vsub.f32 %v552, %v10
  %v556 = vlaneseq
  %v557 = vshrl.u32 %v556, 7
  %v558 = vsub.s32 0, %v557
  %v559 = vrot.slane %v14, %v558
  %v560 = vsub.f32 %v559, %v13
  %v561 = vsub.f32 %v559, %v14
  %v562 = vsub.f32 %v559, %v15
  %v563 = vlaneseq
  %v564 = vshrl.u32 %v563, 7
  %v565 = vsub.s32 0, %v564
  %v566 = vrot.slane %v19, %v565
  %v567 = vsub.f32 %v566, %v18
  %v568 = vsub.f32 %v566, %v19
  %v569 = vsub.f32 %v566, %v20
  %v570 = vmul.f32 %v553, %v553
  %v571 = vmul.f32 %v554, %v554
  %v572 = vmul.f32 %v555, %v555
  %v573 = vmul.f32 %v560, %v560
  %v574 = vmul.f32 %v561, %v561
  %v575 = vmul.f32 %v562, %v562
  %v576 = vadd.f32 %v570, %v573
  %v577 = vadd.f32 %v571, %v574
  %v578 = vadd.f32 %v572, %v575
  %v579 = vmul.f32 %v567, %v567
  %v580 = vmul.f32 %v568, %v568
  %v581 = vmul.f32 %v569, %v569
  %v582 = vadd.f32 %v576, %v579
  %v583 = vadd.f32 %v577, %v580
  %v584 = vadd.f32 %v578, %v581
  %v585 = vmax.f32 %v582, 1e-20
  %v586 = vmax.f32 %v583, 1e-20
  %v587 = vmax.f32 %v584, 1e-20
  %v588 = vrsqrt.pop %v585
  %v589 = vrsqrt.pop %v586
  %v590 = vrsqrt.pop %v587
  %v591 = vmul.f32 %v588, %v588
  %v592 = vmul.f32 %v589, %v589
  %v593 = vmul.f32 %v590, %v590
  %v594 = vmul.f32 %v591, %v588
  %v595 = vmul.f32 %v592, %v589
  %v596 = vmul.f32 %v593, %v590
  %v597 = vmul.f32 %v553, %v594
  %v598 = vmul.f32 %v554, %v595
  %v599 = vmul.f32 %v555, %v596
  %v600 = vadd.f32 %v534, %v597
  %v601 = vadd.f32 %v535, %v598
  %v602 = vadd.f32 %v536, %v599
  %v603 = vmul.f32 %v560, %v594
  %v604 = vmul.f32 %v561, %v595
  %v605 = vmul.f32 %v562, %v596
  %v606 = vadd.f32 %v540, %v603
  %v607 = vadd.f32 %v541, %v604
  %v608 = vadd.f32 %v542, %v605
  %v609 = vmul.f32 %v567, %v594
  %v610 = vmul.f32 %v568, %v595
  %v611 = vmul.f32 %v569, %v596
  %v612 = vadd.f32 %v546, %v609
  %v613 = vadd.f32 %v547, %v610
  %v614 = vadd.f32 %v548, %v611
  %v615 = vlaneseq
  %v616 = vshrl.u32 %v615, 7
  %v617 = vsub.s32 1, %v616
  %v618 = vrot.slane %v9, %v617
  %v619 = vsub.f32 %v618, %v8
  %v620 = vsub.f32 %v618, %v9
  %v621 = vsub.f32 %v618, %v10
  %v622 = vlaneseq
  %v623 = vshrl.u32 %v622, 7
  %v624 = vsub.s32 1, %v623
  %v625 = vrot.slane %v14, %v624
  %v626 = vsub.f32 %v625, %v13
  %v627 = vsub.f32 %v625, %v14
  %v628 = vsub.f32 %v625, %v15
  %v629 = vlaneseq
  %v630 = vshrl.u32 %v629, 7
  %v631 = vsub.s32 1, %v630
  %v632 = vrot.slane %v19, %v631
  %v633 = vsub.f32 %v632, %v18
  %v634 = vsub.f32 %v632, %v19
  %v635 = vsub.f32 %v632, %v20
  %v636 = vmul.f32 %v619, %v619
  %v637 = vmul.f32 %v620, %v620
  %v638 = vmul.f32 %v621, %v621
  %v639 = vmul.f32 %v626, %v626
  %v640 = vmul.f32 %v627, %v627
  %v641 = vmul.f32 %v628, %v628
  %v642 = vadd.f32 %v636, %v639
  %v643 = vadd.f32 %v637, %v640
  %v644 = vadd.f32 %v638, %v641
  %v645 = vmul.f32 %v633, %v633
  %v646 = vmul.f32 %v634, %v634
  %v647 = vmul.f32 %v635, %v635
  %v648 = vadd.f32 %v642, %v645
  %v649 = vadd.f32 %v643, %v646
  %v650 = vadd.f32 %v644, %v647
  %v651 = vmax.f32 %v648, 1e-20
  %v652 = vmax.f32 %v649, 1e-20
  %v653 = vmax.f32 %v650, 1e-20
  %v654 = vrsqrt.pop %v651
  %v655 = vrsqrt.pop %v652
  %v656 = vrsqrt.pop %v653
  %v657 = vmul.f32 %v654, %v654
  %v658 = vmul.f32 %v655, %v655
  %v659 = vmul.f32 %v656, %v656
  %v660 = vmul.f32 %v657, %v654
  %v661 = vmul.f32 %v658, %v655
  %v662 = vmul.f32 %v659, %v656
  %v663 = vmul.f32 %v619, %v660
  %v664 = vmul.f32 %v620, %v661
  %v665 = vmul.f32 %v621, %v662
  %v666 = vadd.f32 %v600, %v663
  %v667 = vadd.f32 %v601, %v664
  %v668 = vadd.f32 %v602, %v665
  %v669 = vmul.f32 %v626, %v660
  %v670 = vmul.f32 %v627, %v661
  %v671 = vmul.f32 %v628, %v662
  %v672 = vadd.f32 %v606, %v669
  %v673 = vadd.f32 %v607, %v670
  %v674 = vadd.f32 %v608, %v671
  %v675 = vmul.f32 %v633, %v660
  %v676 = vmul.f32 %v634, %v661
  %v677 = vmul.f32 %v635, %v662
  %v678 = vadd.f32 %v612, %v675
  %v679 = vadd.f32 %v613, %v676
  %v680 = vadd.f32 %v614, %v677
  %v681 = vlaneseq
  %v682 = vshrl.u32 %v681, 7
  %v683 = vsub.s32 2, %v682
  %v684 = vrot.slane %v9, %v683
  %v685 = vsub.f32 %v684, %v8
  %v686 = vsub.f32 %v684, %v9
  %v687 = vsub.f32 %v684, %v10
  %v688 = vlaneseq
  %v689 = vshrl.u32 %v688, 7
  %v690 = vsub.s32 2, %v689
  %v691 = vrot.slane %v14, %v690
  %v692 = vsub.f32 %v691, %v13
  %v693 = vsub.f32 %v691, %v14
  %v694 = vsub.f32 %v691, %v15
  %v695 = vlaneseq
  %v696 = vshrl.u32 %v695, 7
  %v697 = vsub.s32 2, %v696
  %v698 = vrot.slane %v19, %v697
  %v699 = vsub.f32 %v698, %v18
  %v700 = vsub.f32 %v698, %v19
  %v701 = vsub.f32 %v698, %v20
  %v702 = vmul.f32 %v685, %v685
  %v703 = vmul.f32 %v686, %v686
  %v704 = vmul.f32 %v687, %v687
  %v705 = vmul.f32 %v692, %v692
  %v706 = vmul.f32 %v693, %v693
  %v707 = vmul.f32 %v694, %v694
  %v708 = vadd.f32 %v702, %v705
  %v709 = vadd.f32 %v703, %v706
  %v710 = vadd.f32 %v704, %v707
  %v711 = vmul.f32 %v699, %v699
  %v712 = vmul.f32 %v700, %v700
  %v713 = vmul.f32 %v701, %v701
  %v714 = vadd.f32 %v708, %v711
  %v715 = vadd.f32 %v709, %v712
  %v716 = vadd.f32 %v710, %v713
  %v717 = vmax.f32 %v714, 1e-20
  %v718 = vmax.f32 %v715, 1e-20
  %v719 = vmax.f32 %v716, 1e-20
  %v720 = vrsqrt.pop %v717
  %v721 = vrsqrt.pop %v718
  %v722 = vrsqrt.pop %v719
  %v723 = vmul.f32 %v720, %v720
  %v724 = vmul.f32 %v721, %v721
  %v725 = vmul.f32 %v722, %v722
  %v726 = vmul.f32 %v723, %v720
  %v727 = vmul.f32 %v724, %v721
  %v728 = vmul.f32 %v725, %v722
  %v729 = vmul.f32 %v685, %v726
  %v730 = vmul.f32 %v686, %v727
  %v731 = vmul.f32 %v687, %v728
  %v732 = vadd.f32 %v666, %v729
  %v733 = vadd.f32 %v667, %v730
  %v734 = vadd.f32 %v668, %v731
  %v735 = vmul.f32 %v692, %v726
  %v736 = vmul.f32 %v693, %v727
  %v737 = vmul.f32 %v694, %v728
  %v738 = vadd.f32 %v672, %v735
  %v739 = vadd.f32 %v673, %v736
  %v740 = vadd.f32 %v674, %v737
  %v741 = vmul.f32 %v699, %v726
  %v742 = vmul.f32 %v700, %v727
  %v743 = vmul.f32 %v701, %v728
  %v744 = vadd.f32 %v678, %v741
  %v745 = vadd.f32 %v679, %v742
  %v746 = vadd.f32 %v680, %v743
  %v747 = vlaneseq
  %v748 = vshrl.u32 %v747, 7
  %v749 = vsub.s32 3, %v748
  %v750 = vrot.slane %v9, %v749
  %v751 = vsub.f32 %v750, %v8
  %v752 = vsub.f32 %v750, %v9
  %v753 = vsub.f32 %v750, %v10
  %v754 = vlaneseq
  %v755 = vshrl.u32 %v754, 7
  %v756 = vsub.s32 3, %v755
  %v757 = vrot.slane %v14, %v756
  %v758 = vsub.f32 %v757, %v13
  %v759 = vsub.f32 %v757, %v14
  %v760 = vsub.f32 %v757, %v15
  %v761 = vlaneseq
  %v762 = vshrl.u32 %v761, 7
  %v763 = vsub.s32 3, %v762
  %v764 = vrot.slane %v19, %v763
  %v765 = vsub.f32 %v764, %v18
  %v766 = vsub.f32 %v764, %v19
  %v767 = vsub.f32 %v764, %v20
  %v768 = vmul.f32 %v751, %v751
  %v769 = vmul.f32 %v752, %v752
  %v770 = vmul.f32 %v753, %v753
  %v771 = vmul.f32 %v758, %v758
  %v772 = vmul.f32 %v759, %v759
  %v773 = vmul.f32 %v760, %v760
  %v774 = vadd.f32 %v768, %v771
  %v775 = vadd.f32 %v769, %v772
  %v776 = vadd.f32 %v770, %v773
  %v777 = vmul.f32 %v765, %v765
  %v778 = vmul.f32 %v766, %v766
  %v779 = vmul.f32 %v767, %v767
  %v780 = vadd.f32 %v774, %v777
  %v781 = vadd.f32 %v775, %v778
  %v782 = vadd.f32 %v776, %v779
  %v783 = vmax.f32 %v780, 1e-20
  %v784 = vmax.f32 %v781, 1e-20
  %v785 = vmax.f32 %v782, 1e-20
  %v786 = vrsqrt.pop %v783
  %v787 = vrsqrt.pop %v784
  %v788 = vrsqrt.pop %v785
  %v789 = vmul.f32 %v786, %v786
  %v790 = vmul.f32 %v787, %v787
  %v791 = vmul.f32 %v788, %v788
  %v792 = vmul.f32 %v789, %v786
  %v793 = vmul.f32 %v790, %v787
  %v794 = vmul.f32 %v791, %v788
  %v795 = vmul.f32 %v751, %v792
  %v796 = vmul.f32 %v752, %v793
  %v797 = vmul.f32 %v753, %v794
  %v798 = vadd.f32 %v732, %v795
  %v799 = vadd.f32 %v733, %v796
  %v800 = vadd.f32 %v734, %v797
  %v801 = vmul.f32 %v758, %v792
  %v802 = vmul.f32 %v759, %v793
  %v803 = vmul.f32 %v760, %v794
  %v804 = vadd.f32 %v738, %v801
  %v805 = vadd.f32 %v739, %v802
  %v806 = vadd.f32 %v740, %v803
  %v807 = vmul.f32 %v765, %v792
  %v808 = vmul.f32 %v766, %v793
  %v809 = vmul.f32 %v767, %v794
  %v810 = vadd.f32 %v744, %v807
  %v811 = vadd.f32 %v745, %v808
  %v812 = vadd.f32 %v746, %v809
  %v813 = vlaneseq
  %v814 = vshrl.u32 %v813, 7
  %v815 = vsub.s32 4, %v814
  %v816 = vrot.slane %v9, %v815
  %v817 = vsub.f32 %v816, %v8
  %v818 = vsub.f32 %v816, %v9
  %v819 = vsub.f32 %v816, %v10
  %v820 = vlaneseq
  %v821 = vshrl.u32 %v820, 7
  %v822 = vsub.s32 4, %v821
  %v823 = vrot.slane %v14, %v822
  %v824 = vsub.f32 %v823, %v13
  %v825 = vsub.f32 %v823, %v14
  %v826 = vsub.f32 %v823, %v15
  %v827 = vlaneseq
  %v828 = vshrl.u32 %v827, 7
  %v829 = vsub.s32 4, %v828
  %v830 = vrot.slane %v19, %v829
  %v831 = vsub.f32 %v830, %v18
  %v832 = vsub.f32 %v830, %v19
  %v833 = vsub.f32 %v830, %v20
  %v834 = vmul.f32 %v817, %v817
  %v835 = vmul.f32 %v818, %v818
  %v836 = vmul.f32 %v819, %v819
  %v837 = vmul.f32 %v824, %v824
  %v838 = vmul.f32 %v825, %v825
  %v839 = vmul.f32 %v826, %v826
  %v840 = vadd.f32 %v834, %v837
  %v841 = vadd.f32 %v835, %v838
  %v842 = vadd.f32 %v836, %v839
  %v843 = vmul.f32 %v831, %v831
  %v844 = vmul.f32 %v832, %v832
  %v845 = vmul.f32 %v833, %v833
  %v846 = vadd.f32 %v840, %v843
  %v847 = vadd.f32 %v841, %v844
  %v848 = vadd.f32 %v842, %v845
  %v849 = vmax.f32 %v846, 1e-20
  %v850 = vmax.f32 %v847, 1e-20
  %v851 = vmax.f32 %v848, 1e-20
  %v852 = vrsqrt.pop %v849
  %v853 = vrsqrt.pop %v850
  %v854 = vrsqrt.pop %v851
  %v855 = vmul.f32 %v852, %v852
  %v856 = vmul.f32 %v853, %v853
  %v857 = vmul.f32 %v854, %v854
  %v858 = vmul.f32 %v855, %v852
  %v859 = vmul.f32 %v856, %v853
  %v860 = vmul.f32 %v857, %v854
  %v861 = vmul.f32 %v817, %v858
  %v862 = vmul.f32 %v818, %v859
  %v863 = vmul.f32 %v819, %v860
  %v864 = vadd.f32 %v798, %v861
  %v865 = vadd.f32 %v799, %v862
  %v866 = vadd.f32 %v800, %v863
  %v867 = vmul.f32 %v824, %v858
  %v868 = vmul.f32 %v825, %v859
  %v869 = vmul.f32 %v826, %v860
  %v870 = vadd.f32 %v804, %v867
  %v871 = vadd.f32 %v805, %v868
  %v872 = vadd.f32 %v806, %v869
  %v873 = vmul.f32 %v831, %v858
  %v874 = vmul.f32 %v832, %v859
  %v875 = vmul.f32 %v833, %v860
  %v876 = vadd.f32 %v810, %v873
  %v877 = vadd.f32 %v811, %v874
  %v878 = vadd.f32 %v812, %v875
  %v879 = vlaneseq
  %v880 = vshrl.u32 %v879, 7
  %v881 = vsub.s32 5, %v880
  %v882 = vrot.slane %v9, %v881
  %v883 = vsub.f32 %v882, %v8
  %v884 = vsub.f32 %v882, %v9
  %v885 = vsub.f32 %v882, %v10
  %v886 = vlaneseq
  %v887 = vshrl.u32 %v886, 7
  %v888 = vsub.s32 5, %v887
  %v889 = vrot.slane %v14, %v888
  %v890 = vsub.f32 %v889, %v13
  %v891 = vsub.f32 %v889, %v14
  %v892 = vsub.f32 %v889, %v15
  %v893 = vlaneseq
  %v894 = vshrl.u32 %v893, 7
  %v895 = vsub.s32 5, %v894
  %v896 = vrot.slane %v19, %v895
  %v897 = vsub.f32 %v896, %v18
  %v898 = vsub.f32 %v896, %v19
  %v899 = vsub.f32 %v896, %v20
  %v900 = vmul.f32 %v883, %v883
  %v901 = vmul.f32 %v884, %v884
  %v902 = vmul.f32 %v885, %v885
  %v903 = vmul.f32 %v890, %v890
  %v904 = vmul.f32 %v891, %v891
  %v905 = vmul.f32 %v892, %v892
  %v906 = vadd.f32 %v900, %v903
  %v907 = vadd.f32 %v901, %v904
  %v908 = vadd.f32 %v902, %v905
  %v909 = vmul.f32 %v897, %v897
  %v910 = vmul.f32 %v898, %v898
  %v911 = vmul.f32 %v899, %v899
  %v912 = vadd.f32 %v906, %v909
  %v913 = vadd.f32 %v907, %v910
  %v914 = vadd.f32 %v908, %v911
  %v915 = vmax.f32 %v912, 1e-20
  %v916 = vmax.f32 %v913, 1e-20
  %v917 = vmax.f32 %v914, 1e-20
  %v918 = vrsqrt.pop %v915
  %v919 = vrsqrt.pop %v916
  %v920 = vrsqrt.pop %v917
  %v921 = vmul.f32 %v918, %v918
  %v922 = vmul.f32 %v919, %v919
  %v923 = vmul.f32 %v920, %v920
  %v924 = vmul.f32 %v921, %v918
  %v925 = vmul.f32 %v922, %v919
  %v926 = vmul.f32 %v923, %v920
  %v927 = vmul.f32 %v883, %v924
  %v928 = vmul.f32 %v884, %v925
  %v929 = vmul.f32 %v885, %v926
  %v930 = vadd.f32 %v864, %v927
  %v931 = vadd.f32 %v865, %v928
  %v932 = vadd.f32 %v866, %v929
  %v933 = vmul.f32 %v890, %v924
  %v934 = vmul.f32 %v891, %v925
  %v935 = vmul.f32 %v892, %v926
  %v936 = vadd.f32 %v870, %v933
  %v937 = vadd.f32 %v871, %v934
  %v938 = vadd.f32 %v872, %v935
  %v939 = vmul.f32 %v897, %v924
  %v940 = vmul.f32 %v898, %v925
  %v941 = vmul.f32 %v899, %v926
  %v942 = vadd.f32 %v876, %v939
  %v943 = vadd.f32 %v877, %v940
  %v944 = vadd.f32 %v878, %v941
  %v945 = vlaneseq
  %v946 = vshrl.u32 %v945, 7
  %v947 = vsub.s32 6, %v946
  %v948 = vrot.slane %v9, %v947
  %v949 = vsub.f32 %v948, %v8
  %v950 = vsub.f32 %v948, %v9
  %v951 = vsub.f32 %v948, %v10
  %v952 = vlaneseq
  %v953 = vshrl.u32 %v952, 7
  %v954 = vsub.s32 6, %v953
  %v955 = vrot.slane %v14, %v954
  %v956 = vsub.f32 %v955, %v13
  %v957 = vsub.f32 %v955, %v14
  %v958 = vsub.f32 %v955, %v15
  %v959 = vlaneseq
  %v960 = vshrl.u32 %v959, 7
  %v961 = vsub.s32 6, %v960
  %v962 = vrot.slane %v19, %v961
  %v963 = vsub.f32 %v962, %v18
  %v964 = vsub.f32 %v962, %v19
  %v965 = vsub.f32 %v962, %v20
  %v966 = vmul.f32 %v949, %v949
  %v967 = vmul.f32 %v950, %v950
  %v968 = vmul.f32 %v951, %v951
  %v969 = vmul.f32 %v956, %v956
  %v970 = vmul.f32 %v957, %v957
  %v971 = vmul.f32 %v958, %v958
  %v972 = vadd.f32 %v966, %v969
  %v973 = vadd.f32 %v967, %v970
  %v974 = vadd.f32 %v968, %v971
  %v975 = vmul.f32 %v963, %v963
  %v976 = vmul.f32 %v964, %v964
  %v977 = vmul.f32 %v965, %v965
  %v978 = vadd.f32 %v972, %v975
  %v979 = vadd.f32 %v973, %v976
  %v980 = vadd.f32 %v974, %v977
  %v981 = vmax.f32 %v978, 1e-20
  %v982 = vmax.f32 %v979, 1e-20
  %v983 = vmax.f32 %v980, 1e-20
  %v984 = vrsqrt.pop %v981
  %v985 = vrsqrt.pop %v982
  %v986 = vrsqrt.pop %v983
  %v987 = vmul.f32 %v984, %v984
  %v988 = vmul.f32 %v985, %v985
  %v989 = vmul.f32 %v986, %v986
  %v990 = vmul.f32 %v987, %v984
  %v991 = vmul.f32 %v988, %v985
  %v992 = vmul.f32 %v989, %v986
  %v993 = vmul.f32 %v949, %v990
  %v994 = vmul.f32 %v950, %v991
  %v995 = vmul.f32 %v951, %v992
  %v996 = vadd.f32 %v930, %v993
  %v997 = vadd.f32 %v931, %v994
  %v998 = vadd.f32 %v932, %v995
  %v999 = vmul.f32 %v956, %v990
  %v1000 = vmul.f32 %v957, %v991
  %v1001 = vmul.f32 %v958, %v992
  %v1002 = vadd.f32 %v936, %v999
  %v1003 = vadd.f32 %v937, %v1000
  %v1004 = vadd.f32 %v938, %v1001
  %v1005 = vmul.f32 %v963, %v990
  %v1006 = vmul.f32 %v964, %v991
  %v1007 = vmul.f32 %v965, %v992
  %v1008 = vadd.f32 %v942, %v1005
  %v1009 = vadd.f32 %v943, %v1006
  %v1010 = vadd.f32 %v944, %v1007
  %v1011 = vlaneseq
  %v1012 = vshrl.u32 %v1011, 7
  %v1013 = vsub.s32 7, %v1012
  %v1014 = vrot.slane %v9, %v1013
  %v1015 = vsub.f32 %v1014, %v8
  %v1016 = vsub.f32 %v1014, %v9
  %v1017 = vsub.f32 %v1014, %v10
  %v1018 = vlaneseq
  %v1019 = vshrl.u32 %v1018, 7
  %v1020 = vsub.s32 7, %v1019
  %v1021 = vrot.slane %v14, %v1020
  %v1022 = vsub.f32 %v1021, %v13
  %v1023 = vsub.f32 %v1021, %v14
  %v1024 = vsub.f32 %v1021, %v15
  %v1025 = vlaneseq
  %v1026 = vshrl.u32 %v1025, 7
  %v1027 = vsub.s32 7, %v1026
  %v1028 = vrot.slane %v19, %v1027
  %v1029 = vsub.f32 %v1028, %v18
  %v1030 = vsub.f32 %v1028, %v19
  %v1031 = vsub.f32 %v1028, %v20
  %v1032 = vmul.f32 %v1015, %v1015
  %v1033 = vmul.f32 %v1016, %v1016
  %v1034 = vmul.f32 %v1017, %v1017
  %v1035 = vmul.f32 %v1022, %v1022
  %v1036 = vmul.f32 %v1023, %v1023
  %v1037 = vmul.f32 %v1024, %v1024
  %v1038 = vadd.f32 %v1032, %v1035
  %v1039 = vadd.f32 %v1033, %v1036
  %v1040 = vadd.f32 %v1034, %v1037
  %v1041 = vmul.f32 %v1029, %v1029
  %v1042 = vmul.f32 %v1030, %v1030
  %v1043 = vmul.f32 %v1031, %v1031
  %v1044 = vadd.f32 %v1038, %v1041
  %v1045 = vadd.f32 %v1039, %v1042
  %v1046 = vadd.f32 %v1040, %v1043
  %v1047 = vmax.f32 %v1044, 1e-20
  %v1048 = vmax.f32 %v1045, 1e-20
  %v1049 = vmax.f32 %v1046, 1e-20
  %v1050 = vrsqrt.pop %v1047
  %v1051 = vrsqrt.pop %v1048
  %v1052 = vrsqrt.pop %v1049
  %v1053 = vmul.f32 %v1050, %v1050
  %v1054 = vmul.f32 %v1051, %v1051
  %v1055 = vmul.f32 %v1052, %v1052
  %v1056 = vmul.f32 %v1053, %v1050
  %v1057 = vmul.f32 %v1054, %v1051
  %v1058 = vmul.f32 %v1055, %v1052
  %v1059 = vmul.f32 %v1015, %v1056
  %v1060 = vmul.f32 %v1016, %v1057
  %v1061 = vmul.f32 %v1017, %v1058
  %v1062 = vadd.f32 %v996, %v1059
  %v1063 = vadd.f32 %v997, %v1060
  %v1064 = vadd.f32 %v998, %v1061
  %v1065 = vmul.f32 %v1022, %v1056
  %v1066 = vmul.f32 %v1023, %v1057
  %v1067 = vmul.f32 %v1024, %v1058
  %v1068 = vadd.f32 %v1002, %v1065
  %v1069 = vadd.f32 %v1003, %v1066
  %v1070 = vadd.f32 %v1004, %v1067
  %v1071 = vmul.f32 %v1029, %v1056
  %v1072 = vmul.f32 %v1030, %v1057
  %v1073 = vmul.f32 %v1031, %v1058
  %v1074 = vadd.f32 %v1008, %v1071
  %v1075 = vadd.f32 %v1009, %v1072
  %v1076 = vadd.f32 %v1010, %v1073
  %v1077 = vlaneseq
  %v1078 = vshrl.u32 %v1077, 7
  %v1079 = vsub.s32 0, %v1078
  %v1080 = vrot.slane %v10, %v1079
  %v1081 = vsub.f32 %v1080, %v8
  %v1082 = vsub.f32 %v1080, %v9
  %v1083 = vsub.f32 %v1080, %v10
  %v1084 = vlaneseq
  %v1085 = vshrl.u32 %v1084, 7
  %v1086 = vsub.s32 0, %v1085
  %v1087 = vrot.slane %v15, %v1086
  %v1088 = vsub.f32 %v1087, %v13
  %v1089 = vsub.f32 %v1087, %v14
  %v1090 = vsub.f32 %v1087, %v15
  %v1091 = vlaneseq
  %v1092 = vshrl.u32 %v1091, 7
  %v1093 = vsub.s32 0, %v1092
  %v1094 = vrot.slane %v20, %v1093
  %v1095 = vsub.f32 %v1094, %v18
  %v1096 = vsub.f32 %v1094, %v19
  %v1097 = vsub.f32 %v1094, %v20
  %v1098 = vmul.f32 %v1081, %v1081
  %v1099 = vmul.f32 %v1082, %v1082
  %v1100 = vmul.f32 %v1083, %v1083
  %v1101 = vmul.f32 %v1088, %v1088
  %v1102 = vmul.f32 %v1089, %v1089
  %v1103 = vmul.f32 %v1090, %v1090
  %v1104 = vadd.f32 %v1098, %v1101
  %v1105 = vadd.f32 %v1099, %v1102
  %v1106 = vadd.f32 %v1100, %v1103
  %v1107 = vmul.f32 %v1095, %v1095
  %v1108 = vmul.f32 %v1096, %v1096
  %v1109 = vmul.f32 %v1097, %v1097
  %v1110 = vadd.f32 %v1104, %v1107
  %v1111 = vadd.f32 %v1105, %v1108
  %v1112 = vadd.f32 %v1106, %v1109
  %v1113 = vmax.f32 %v1110, 1e-20
  %v1114 = vmax.f32 %v1111, 1e-20
  %v1115 = vmax.f32 %v1112, 1e-20
  %v1116 = vrsqrt.pop %v1113
  %v1117 = vrsqrt.pop %v1114
  %v1118 = vrsqrt.pop %v1115
  %v1119 = vmul.f32 %v1116, %v1116
  %v1120 = vmul.f32 %v1117, %v1117
  %v1121 = vmul.f32 %v1118, %v1118
  %v1122 = vmul.f32 %v1119, %v1116
  %v1123 = vmul.f32 %v1120, %v1117
  %v1124 = vmul.f32 %v1121, %v1118
  %v1125 = vmul.f32 %v1081, %v1122
  %v1126 = vmul.f32 %v1082, %v1123
  %v1127 = vmul.f32 %v1083, %v1124
  %v1128 = vadd.f32 %v1062, %v1125
  %v1129 = vadd.f32 %v1063, %v1126
  %v1130 = vadd.f32 %v1064, %v1127
  %v1131 = vmul.f32 %v1088, %v1122
  %v1132 = vmul.f32 %v1089, %v1123
  %v1133 = vmul.f32 %v1090, %v1124
  %v1134 = vadd.f32 %v1068, %v1131
  %v1135 = vadd.f32 %v1069, %v1132
  %v1136 = vadd.f32 %v1070, %v1133
  %v1137 = vmul.f32 %v1095, %v1122
  %v1138 = vmul.f32 %v1096, %v1123
  %v1139 = vmul.f32 %v1097, %v1124
  %v1140 = vadd.f32 %v1074, %v1137
  %v1141 = vadd.f32 %v1075, %v1138
  %v1142 = vadd.f32 %v1076, %v1139
  %v1143 = vlaneseq
  %v1144 = vshrl.u32 %v1143, 7
  %v1145 = vsub.s32 1, %v1144
  %v1146 = vrot.slane %v10, %v1145
  %v1147 = vsub.f32 %v1146, %v8
  %v1148 = vsub.f32 %v1146, %v9
  %v1149 = vsub.f32 %v1146, %v10
  %v1150 = vlaneseq
  %v1151 = vshrl.u32 %v1150, 7
  %v1152 = vsub.s32 1, %v1151
  %v1153 = vrot.slane %v15, %v1152
  %v1154 = vsub.f32 %v1153, %v13
  %v1155 = vsub.f32 %v1153, %v14
  %v1156 = vsub.f32 %v1153, %v15
  %v1157 = vlaneseq
  %v1158 = vshrl.u32 %v1157, 7
  %v1159 = vsub.s32 1, %v1158
  %v1160 = vrot.slane %v20, %v1159
  %v1161 = vsub.f32 %v1160, %v18
  %v1162 = vsub.f32 %v1160, %v19
  %v1163 = vsub.f32 %v1160, %v20
  %v1164 = vmul.f32 %v1147, %v1147
  %v1165 = vmul.f32 %v1148, %v1148
  %v1166 = vmul.f32 %v1149, %v1149
  %v1167 = vmul.f32 %v1154, %v1154
  %v1168 = vmul.f32 %v1155, %v1155
  %v1169 = vmul.f32 %v1156, %v1156
  %v1170 = vadd.f32 %v1164, %v1167
  %v1171 = vadd.f32 %v1165, %v1168
  %v1172 = vadd.f32 %v1166, %v1169
  %v1173 = vmul.f32 %v1161, %v1161
  %v1174 = vmul.f32 %v1162, %v1162
  %v1175 = vmul.f32 %v1163, %v1163
  %v1176 = vadd.f32 %v1170, %v1173
  %v1177 = vadd.f32 %v1171, %v1174
  %v1178 = vadd.f32 %v1172, %v1175
  %v1179 = vmax.f32 %v1176, 1e-20
  %v1180 = vmax.f32 %v1177, 1e-20
  %v1181 = vmax.f32 %v1178, 1e-20
  %v1182 = vrsqrt.pop %v1179
  %v1183 = vrsqrt.pop %v1180
  %v1184 = vrsqrt.pop %v1181
  %v1185 = vmul.f32 %v1182, %v1182
  %v1186 = vmul.f32 %v1183, %v1183
  %v1187 = vmul.f32 %v1184, %v1184
  %v1188 = vmul.f32 %v1185, %v1182
  %v1189 = vmul.f32 %v1186, %v1183
  %v1190 = vmul.f32 %v1187, %v1184
  %v1191 = vmul.f32 %v1147, %v1188
  %v1192 = vmul.f32 %v1148, %v1189
  %v1193 = vmul.f32 %v1149, %v1190
  %v1194 = vadd.f32 %v1128, %v1191
  %v1195 = vadd.f32 %v1129, %v1192
  %v1196 = vadd.f32 %v1130, %v1193
  %v1197 = vmul.f32 %v1154, %v1188
  %v1198 = vmul.f32 %v1155, %v1189
  %v1199 = vmul.f32 %v1156, %v1190
  %v1200 = vadd.f32 %v1134, %v1197
  %v1201 = vadd.f32 %v1135, %v1198
  %v1202 = vadd.f32 %v1136, %v1199
  %v1203 = vmul.f32 %v1161, %v1188
  %v1204 = vmul.f32 %v1162, %v1189
  %v1205 = vmul.f32 %v1163, %v1190
  %v1206 = vadd.f32 %v1140, %v1203
  %v1207 = vadd.f32 %v1141, %v1204
  %v1208 = vadd.f32 %v1142, %v1205
  %v1209 = vlaneseq
  %v1210 = vshrl.u32 %v1209, 7
  %v1211 = vsub.s32 2, %v1210
  %v1212 = vrot.slane %v10, %v1211
  %v1213 = vsub.f32 %v1212, %v8
  %v1214 = vsub.f32 %v1212, %v9
  %v1215 = vsub.f32 %v1212, %v10
  %v1216 = vlaneseq
  %v1217 = vshrl.u32 %v1216, 7
  %v1218 = vsub.s32 2, %v1217
  %v1219 = vrot.slane %v15, %v1218
  %v1220 = vsub.f32 %v1219, %v13
  %v1221 = vsub.f32 %v1219, %v14
  %v1222 = vsub.f32 %v1219, %v15
  %v1223 = vlaneseq
  %v1224 = vshrl.u32 %v1223, 7
  %v1225 = vsub.s32 2, %v1224
  %v1226 = vrot.slane %v20, %v1225
  %v1227 = vsub.f32 %v1226, %v18
  %v1228 = vsub.f32 %v1226, %v19
  %v1229 = vsub.f32 %v1226, %v20
  %v1230 = vmul.f32 %v1213, %v1213
  %v1231 = vmul.f32 %v1214, %v1214
  %v1232 = vmul.f32 %v1215, %v1215
  %v1233 = vmul.f32 %v1220, %v1220
  %v1234 = vmul.f32 %v1221, %v1221
  %v1235 = vmul.f32 %v1222, %v1222
  %v1236 = vadd.f32 %v1230, %v1233
  %v1237 = vadd.f32 %v1231, %v1234
  %v1238 = vadd.f32 %v1232, %v1235
  %v1239 = vmul.f32 %v1227, %v1227
  %v1240 = vmul.f32 %v1228, %v1228
  %v1241 = vmul.f32 %v1229, %v1229
  %v1242 = vadd.f32 %v1236, %v1239
  %v1243 = vadd.f32 %v1237, %v1240
  %v1244 = vadd.f32 %v1238, %v1241
  %v1245 = vmax.f32 %v1242, 1e-20
  %v1246 = vmax.f32 %v1243, 1e-20
  %v1247 = vmax.f32 %v1244, 1e-20
  %v1248 = vrsqrt.pop %v1245
  %v1249 = vrsqrt.pop %v1246
  %v1250 = vrsqrt.pop %v1247
  %v1251 = vmul.f32 %v1248, %v1248
  %v1252 = vmul.f32 %v1249, %v1249
  %v1253 = vmul.f32 %v1250, %v1250
  %v1254 = vmul.f32 %v1251, %v1248
  %v1255 = vmul.f32 %v1252, %v1249
  %v1256 = vmul.f32 %v1253, %v1250
  %v1257 = vmul.f32 %v1213, %v1254
  %v1258 = vmul.f32 %v1214, %v1255
  %v1259 = vmul.f32 %v1215, %v1256
  %v1260 = vadd.f32 %v1194, %v1257
  %v1261 = vadd.f32 %v1195, %v1258
  %v1262 = vadd.f32 %v1196, %v1259
  %v1263 = vmul.f32 %v1220, %v1254
  %v1264 = vmul.f32 %v1221, %v1255
  %v1265 = vmul.f32 %v1222, %v1256
  %v1266 = vadd.f32 %v1200, %v1263
  %v1267 = vadd.f32 %v1201, %v1264
  %v1268 = vadd.f32 %v1202, %v1265
  %v1269 = vmul.f32 %v1227, %v1254
  %v1270 = vmul.f32 %v1228, %v1255
  %v1271 = vmul.f32 %v1229, %v1256
  %v1272 = vadd.f32 %v1206, %v1269
  %v1273 = vadd.f32 %v1207, %v1270
  %v1274 = vadd.f32 %v1208, %v1271
  %v1275 = vlaneseq
  %v1276 = vshrl.u32 %v1275, 7
  %v1277 = vsub.s32 3, %v1276
  %v1278 = vrot.slane %v10, %v1277
  %v1279 = vsub.f32 %v1278, %v8
  %v1280 = vsub.f32 %v1278, %v9
  %v1281 = vsub.f32 %v1278, %v10
  %v1282 = vlaneseq
  %v1283 = vshrl.u32 %v1282, 7
  %v1284 = vsub.s32 3, %v1283
  %v1285 = vrot.slane %v15, %v1284
  %v1286 = vsub.f32 %v1285, %v13
  %v1287 = vsub.f32 %v1285, %v14
  %v1288 = vsub.f32 %v1285, %v15
  %v1289 = vlaneseq
  %v1290 = vshrl.u32 %v1289, 7
  %v1291 = vsub.s32 3, %v1290
  %v1292 = vrot.slane %v20, %v1291
  %v1293 = vsub.f32 %v1292, %v18
  %v1294 = vsub.f32 %v1292, %v19
  %v1295 = vsub.f32 %v1292, %v20
  %v1296 = vmul.f32 %v1279, %v1279
  %v1297 = vmul.f32 %v1280, %v1280
  %v1298 = vmul.f32 %v1281, %v1281
  %v1299 = vmul.f32 %v1286, %v1286
  %v1300 = vmul.f32 %v1287, %v1287
  %v1301 = vmul.f32 %v1288, %v1288
  %v1302 = vadd.f32 %v1296, %v1299
  %v1303 = vadd.f32 %v1297, %v1300
  %v1304 = vadd.f32 %v1298, %v1301
  %v1305 = vmul.f32 %v1293, %v1293
  %v1306 = vmul.f32 %v1294, %v1294
  %v1307 = vmul.f32 %v1295, %v1295
  %v1308 = vadd.f32 %v1302, %v1305
  %v1309 = vadd.f32 %v1303, %v1306
  %v1310 = vadd.f32 %v1304, %v1307
  %v1311 = vmax.f32 %v1308, 1e-20
  %v1312 = vmax.f32 %v1309, 1e-20
  %v1313 = vmax.f32 %v1310, 1e-20
  %v1314 = vrsqrt.pop %v1311
  %v1315 = vrsqrt.pop %v1312
  %v1316 = vrsqrt.pop %v1313
  %v1317 = vmul.f32 %v1314, %v1314
  %v1318 = vmul.f32 %v1315, %v1315
  %v1319 = vmul.f32 %v1316, %v1316
  %v1320 = vmul.f32 %v1317, %v1314
  %v1321 = vmul.f32 %v1318, %v1315
  %v1322 = vmul.f32 %v1319, %v1316
  %v1323 = vmul.f32 %v1279, %v1320
  %v1324 = vmul.f32 %v1280, %v1321
  %v1325 = vmul.f32 %v1281, %v1322
  %v1326 = vadd.f32 %v1260, %v1323
  %v1327 = vadd.f32 %v1261, %v1324
  %v1328 = vadd.f32 %v1262, %v1325
  %v1329 = vmul.f32 %v1286, %v1320
  %v1330 = vmul.f32 %v1287, %v1321
  %v1331 = vmul.f32 %v1288, %v1322
  %v1332 = vadd.f32 %v1266, %v1329
  %v1333 = vadd.f32 %v1267, %v1330
  %v1334 = vadd.f32 %v1268, %v1331
  %v1335 = vmul.f32 %v1293, %v1320
  %v1336 = vmul.f32 %v1294, %v1321
  %v1337 = vmul.f32 %v1295, %v1322
  %v1338 = vadd.f32 %v1272, %v1335
  %v1339 = vadd.f32 %v1273, %v1336
  %v1340 = vadd.f32 %v1274, %v1337
  %v1341 = vlaneseq
  %v1342 = vshrl.u32 %v1341, 7
  %v1343 = vsub.s32 4, %v1342
  %v1344 = vrot.slane %v10, %v1343
  %v1345 = vsub.f32 %v1344, %v8
  %v1346 = vsub.f32 %v1344, %v9
  %v1347 = vsub.f32 %v1344, %v10
  %v1348 = vlaneseq
  %v1349 = vshrl.u32 %v1348, 7
  %v1350 = vsub.s32 4, %v1349
  %v1351 = vrot.slane %v15, %v1350
  %v1352 = vsub.f32 %v1351, %v13
  %v1353 = vsub.f32 %v1351, %v14
  %v1354 = vsub.f32 %v1351, %v15
  %v1355 = vlaneseq
  %v1356 = vshrl.u32 %v1355, 7
  %v1357 = vsub.s32 4, %v1356
  %v1358 = vrot.slane %v20, %v1357
  %v1359 = vsub.f32 %v1358, %v18
  %v1360 = vsub.f32 %v1358, %v19
  %v1361 = vsub.f32 %v1358, %v20
  %v1362 = vmul.f32 %v1345, %v1345
  %v1363 = vmul.f32 %v1346, %v1346
  %v1364 = vmul.f32 %v1347, %v1347
  %v1365 = vmul.f32 %v1352, %v1352
  %v1366 = vmul.f32 %v1353, %v1353
  %v1367 = vmul.f32 %v1354, %v1354
  %v1368 = vadd.f32 %v1362, %v1365
  %v1369 = vadd.f32 %v1363, %v1366
  %v1370 = vadd.f32 %v1364, %v1367
  %v1371 = vmul.f32 %v1359, %v1359
  %v1372 = vmul.f32 %v1360, %v1360
  %v1373 = vmul.f32 %v1361, %v1361
  %v1374 = vadd.f32 %v1368, %v1371
  %v1375 = vadd.f32 %v1369, %v1372
  %v1376 = vadd.f32 %v1370, %v1373
  %v1377 = vmax.f32 %v1374, 1e-20
  %v1378 = vmax.f32 %v1375, 1e-20
  %v1379 = vmax.f32 %v1376, 1e-20
  %v1380 = vrsqrt.pop %v1377
  %v1381 = vrsqrt.pop %v1378
  %v1382 = vrsqrt.pop %v1379
  %v1383 = vmul.f32 %v1380, %v1380
  %v1384 = vmul.f32 %v1381, %v1381
  %v1385 = vmul.f32 %v1382, %v1382
  %v1386 = vmul.f32 %v1383, %v1380
  %v1387 = vmul.f32 %v1384, %v1381
  %v1388 = vmul.f32 %v1385, %v1382
  %v1389 = vmul.f32 %v1345, %v1386
  %v1390 = vmul.f32 %v1346, %v1387
  %v1391 = vmul.f32 %v1347, %v1388
  %v1392 = vadd.f32 %v1326, %v1389
  %v1393 = vadd.f32 %v1327, %v1390
  %v1394 = vadd.f32 %v1328, %v1391
  %v1395 = vmul.f32 %v1352, %v1386
  %v1396 = vmul.f32 %v1353, %v1387
  %v1397 = vmul.f32 %v1354, %v1388
  %v1398 = vadd.f32 %v1332, %v1395
  %v1399 = vadd.f32 %v1333, %v1396
  %v1400 = vadd.f32 %v1334, %v1397
  %v1401 = vmul.f32 %v1359, %v1386
  %v1402 = vmul.f32 %v1360, %v1387
  %v1403 = vmul.f32 %v1361, %v1388
  %v1404 = vadd.f32 %v1338, %v1401
  %v1405 = vadd.f32 %v1339, %v1402
  %v1406 = vadd.f32 %v1340, %v1403
  %v1407 = vlaneseq
  %v1408 = vshrl.u32 %v1407, 7
  %v1409 = vsub.s32 5, %v1408
  %v1410 = vrot.slane %v10, %v1409
  %v1411 = vsub.f32 %v1410, %v8
  %v1412 = vsub.f32 %v1410, %v9
  %v1413 = vsub.f32 %v1410, %v10
  %v1414 = vlaneseq
  %v1415 = vshrl.u32 %v1414, 7
  %v1416 = vsub.s32 5, %v1415
  %v1417 = vrot.slane %v15, %v1416
  %v1418 = vsub.f32 %v1417, %v13
  %v1419 = vsub.f32 %v1417, %v14
  %v1420 = vsub.f32 %v1417, %v15
  %v1421 = vlaneseq
  %v1422 = vshrl.u32 %v1421, 7
  %v1423 = vsub.s32 5, %v1422
  %v1424 = vrot.slane %v20, %v1423
  %v1425 = vsub.f32 %v1424, %v18
  %v1426 = vsub.f32 %v1424, %v19
  %v1427 = vsub.f32 %v1424, %v20
  %v1428 = vmul.f32 %v1411, %v1411
  %v1429 = vmul.f32 %v1412, %v1412
  %v1430 = vmul.f32 %v1413, %v1413
  %v1431 = vmul.f32 %v1418, %v1418
  %v1432 = vmul.f32 %v1419, %v1419
  %v1433 = vmul.f32 %v1420, %v1420
  %v1434 = vadd.f32 %v1428, %v1431
  %v1435 = vadd.f32 %v1429, %v1432
  %v1436 = vadd.f32 %v1430, %v1433
  %v1437 = vmul.f32 %v1425, %v1425
  %v1438 = vmul.f32 %v1426, %v1426
  %v1439 = vmul.f32 %v1427, %v1427
  %v1440 = vadd.f32 %v1434, %v1437
  %v1441 = vadd.f32 %v1435, %v1438
  %v1442 = vadd.f32 %v1436, %v1439
  %v1443 = vmax.f32 %v1440, 1e-20
  %v1444 = vmax.f32 %v1441, 1e-20
  %v1445 = vmax.f32 %v1442, 1e-20
  %v1446 = vrsqrt.pop %v1443
  %v1447 = vrsqrt.pop %v1444
  %v1448 = vrsqrt.pop %v1445
  %v1449 = vmul.f32 %v1446, %v1446
  %v1450 = vmul.f32 %v1447, %v1447
  %v1451 = vmul.f32 %v1448, %v1448
  %v1452 = vmul.f32 %v1449, %v1446
  %v1453 = vmul.f32 %v1450, %v1447
  %v1454 = vmul.f32 %v1451, %v1448
  %v1455 = vmul.f32 %v1411, %v1452
  %v1456 = vmul.f32 %v1412, %v1453
  %v1457 = vmul.f32 %v1413, %v1454
  %v1458 = vadd.f32 %v1392, %v1455
  %v1459 = vadd.f32 %v1393, %v1456
  %v1460 = vadd.f32 %v1394, %v1457
  %v1461 = vmul.f32 %v1418, %v1452
  %v1462 = vmul.f32 %v1419, %v1453
  %v1463 = vmul.f32 %v1420, %v1454
  %v1464 = vadd.f32 %v1398, %v1461
  %v1465 = vadd.f32 %v1399, %v1462
  %v1466 = vadd.f32 %v1400, %v1463
  %v1467 = vmul.f32 %v1425, %v1452
  %v1468 = vmul.f32 %v1426, %v1453
  %v1469 = vmul.f32 %v1427, %v1454
  %v1470 = vadd.f32 %v1404, %v1467
  %v1471 = vadd.f32 %v1405, %v1468
  %v1472 = vadd.f32 %v1406, %v1469
  %v1473 = vlaneseq
  %v1474 = vshrl.u32 %v1473, 7
  %v1475 = vsub.s32 6, %v1474
  %v1476 = vrot.slane %v10, %v1475
  %v1477 = vsub.f32 %v1476, %v8
  %v1478 = vsub.f32 %v1476, %v9
  %v1479 = vsub.f32 %v1476, %v10
  %v1480 = vlaneseq
  %v1481 = vshrl.u32 %v1480, 7
  %v1482 = vsub.s32 6, %v1481
  %v1483 = vrot.slane %v15, %v1482
  %v1484 = vsub.f32 %v1483, %v13
  %v1485 = vsub.f32 %v1483, %v14
  %v1486 = vsub.f32 %v1483, %v15
  %v1487 = vlaneseq
  %v1488 = vshrl.u32 %v1487, 7
  %v1489 = vsub.s32 6, %v1488
  %v1490 = vrot.slane %v20, %v1489
  %v1491 = vsub.f32 %v1490, %v18
  %v1492 = vsub.f32 %v1490, %v19
  %v1493 = vsub.f32 %v1490, %v20
  %v1494 = vmul.f32 %v1477, %v1477
  %v1495 = vmul.f32 %v1478, %v1478
  %v1496 = vmul.f32 %v1479, %v1479
  %v1497 = vmul.f32 %v1484, %v1484
  %v1498 = vmul.f32 %v1485, %v1485
  %v1499 = vmul.f32 %v1486, %v1486
  %v1500 = vadd.f32 %v1494, %v1497
  %v1501 = vadd.f32 %v1495, %v1498
  %v1502 = vadd.f32 %v1496, %v1499
  %v1503 = vmul.f32 %v1491, %v1491
  %v1504 = vmul.f32 %v1492, %v1492
  %v1505 = vmul.f32 %v1493, %v1493
  %v1506 = vadd.f32 %v1500, %v1503
  %v1507 = vadd.f32 %v1501, %v1504
  %v1508 = vadd.f32 %v1502, %v1505
  %v1509 = vmax.f32 %v1506, 1e-20
  %v1510 = vmax.f32 %v1507, 1e-20
  %v1511 = vmax.f32 %v1508, 1e-20
  %v1512 = vrsqrt.pop %v1509
  %v1513 = vrsqrt.pop %v1510
  %v1514 = vrsqrt.pop %v1511
  %v1515 = vmul.f32 %v1512, %v1512
  %v1516 = vmul.f32 %v1513, %v1513
  %v1517 = vmul.f32 %v1514, %v1514
  %v1518 = vmul.f32 %v1515, %v1512
  %v1519 = vmul.f32 %v1516, %v1513
  %v1520 = vmul.f32 %v1517, %v1514
  %v1521 = vmul.f32 %v1477, %v1518
  %v1522 = vmul.f32 %v1478, %v1519
  %v1523 = vmul.f32 %v1479, %v1520
  %v1524 = vadd.f32 %v1458, %v1521
  %v1525 = vadd.f32 %v1459, %v1522
  %v1526 = vadd.f32 %v1460, %v1523
  %v1527 = vmul.f32 %v1484, %v1518
  %v1528 = vmul.f32 %v1485, %v1519
  %v1529 = vmul.f32 %v1486, %v1520
  %v1530 = vadd.f32 %v1464, %v1527
  %v1531 = vadd.f32 %v1465, %v1528
  %v1532 = vadd.f32 %v1466, %v1529
  %v1533 = vmul.f32 %v1491, %v1518
  %v1534 = vmul.f32 %v1492, %v1519
  %v1535 = vmul.f32 %v1493, %v1520
  %v1536 = vadd.f32 %v1470, %v1533
  %v1537 = vadd.f32 %v1471, %v1534
  %v1538 = vadd.f32 %v1472, %v1535
  %v1539 = vlaneseq
  %v1540 = vshrl.u32 %v1539, 7
  %v1541 = vsub.s32 7, %v1540
  %v1542 = vrot.slane %v10, %v1541
  %v1543 = vsub.f32 %v1542, %v8
  %v1544 = vsub.f32 %v1542, %v9
  %v1545 = vsub.f32 %v1542, %v10
  %v1546 = vlaneseq
  %v1547 = vshrl.u32 %v1546, 7
  %v1548 = vsub.s32 7, %v1547
  %v1549 = vrot.slane %v15, %v1548
  %v1550 = vsub.f32 %v1549, %v13
  %v1551 = vsub.f32 %v1549, %v14
  %v1552 = vsub.f32 %v1549, %v15
  %v1553 = vlaneseq
  %v1554 = vshrl.u32 %v1553, 7
  %v1555 = vsub.s32 7, %v1554
  %v1556 = vrot.slane %v20, %v1555
  %v1557 = vsub.f32 %v1556, %v18
  %v1558 = vsub.f32 %v1556, %v19
  %v1559 = vsub.f32 %v1556, %v20
  %v1560 = vmul.f32 %v1543, %v1543
  %v1561 = vmul.f32 %v1544, %v1544
  %v1562 = vmul.f32 %v1545, %v1545
  %v1563 = vmul.f32 %v1550, %v1550
  %v1564 = vmul.f32 %v1551, %v1551
  %v1565 = vmul.f32 %v1552, %v1552
  %v1566 = vadd.f32 %v1560, %v1563
  %v1567 = vadd.f32 %v1561, %v1564
  %v1568 = vadd.f32 %v1562, %v1565
  %v1569 = vmul.f32 %v1557, %v1557
  %v1570 = vmul.f32 %v1558, %v1558
  %v1571 = vmul.f32 %v1559, %v1559
  %v1572 = vadd.f32 %v1566, %v1569
  %v1573 = vadd.f32 %v1567, %v1570
  %v1574 = vadd.f32 %v1568, %v1571
  %v1575 = vmax.f32 %v1572, 1e-20
  %v1576 = vmax.f32 %v1573, 1e-20
  %v1577 = vmax.f32 %v1574, 1e-20
  %v1578 = vrsqrt.pop %v1575
  %v1579 = vrsqrt.pop %v1576
  %v1580 = vrsqrt.pop %v1577
  %v1581 = vmul.f32 %v1578, %v1578
  %v1582 = vmul.f32 %v1579, %v1579
  %v1583 = vmul.f32 %v1580, %v1580
  %v1584 = vmul.f32 %v1581, %v1578
  %v1585 = vmul.f32 %v1582, %v1579
  %v1586 = vmul.f32 %v1583, %v1580
  %v1587 = vmul.f32 %v1543, %v1584
  %v1588 = vmul.f32 %v1544, %v1585
  %v1589 = vmul.f32 %v1545, %v1586
  %v1590 = vadd.f32 %v1524, %v1587
  %v1591 = vadd.f32 %v1525, %v1588
  %v1592 = vadd.f32 %v1526, %v1589
  %v1593 = vmul.f32 %v1550, %v1584
  %v1594 = vmul.f32 %v1551, %v1585
  %v1595 = vmul.f32 %v1552, %v1586
  %v1596 = vadd.f32 %v1530, %v1593
  %v1597 = vadd.f32 %v1531, %v1594
  %v1598 = vadd.f32 %v1532, %v1595
  %v1599 = vmul.f32 %v1557, %v1584
  %v1600 = vmul.f32 %v1558, %v1585
  %v1601 = vmul.f32 %v1559, %v1586
  %v1602 = vadd.f32 %v1536, %v1599
  %v1603 = vadd.f32 %v1537, %v1600
  %v1604 = vadd.f32 %v1538, %v1601
  %1605 = vst [vmem:[%s1] sm:$0xff] %v1590
  %1606 = vst [vmem:[%s1 + $0x8] sm:$0xff] %v1591
  %1607 = vst [vmem:[%s1 + $0x10] sm:$0xff] %v1592
  %s1608 = scalar_lea.vmem %s1, %s11
  %1609 = vst [vmem:[%s1608] sm:$0xff] %v1596
  %1610 = vst [vmem:[%s1608 + $0x8] sm:$0xff] %v1597
  %1611 = vst [vmem:[%s1608 + $0x10] sm:$0xff] %v1598
  %s1612 = scalar_lea.vmem %s1, %s16
  %1613 = vst [vmem:[%s1612] sm:$0xff] %v1602
  %1614 = vst [vmem:[%s1612 + $0x8] sm:$0xff] %v1603
  %1615 = vst [vmem:[%s1612 + $0x10] sm:$0xff] %v1604
  // Predicated region
  $region6: #{manybody3d_forward.1} parent=0 // pred_check
    _
  $region7: #{manybody3d_forward.1} parent=0 // pred_check_branch
    %1617 = sbr.rel (0) target = $region9
  $region8: #{manybody3d_forward.1} parent=0 // pred_region
    _
  $region9: #{manybody3d_forward.1} parent=0 // pred_fallthru
    _
  // Predicated region
  $region10: #{manybody3d_forward.1} parent=0 // pred_check
    _
  $region11: #{manybody3d_forward.1} parent=0 // pred_check_branch
    %1619 = sbr.rel (0) target = $region13
  $region12: #{manybody3d_forward.1} parent=0 // pred_region
    _
  $region13: #{manybody3d_forward.1} parent=0 // pred_fallthru
    _

</llo_original>
